<compile_context>
chip_gen: v7x
topology: tpu7x:2x2x1
jax: 0.10.0
libtpu: 0.0.40
codegen_flags: <defaults>
</compile_context>

<pallas_src>
import functools

import jax
import jax.numpy as jnp
from jax.experimental import pallas as pl
from jax.experimental.pallas import tpu as pltpu


def _embed_ln_kernel(ids_ref,            # SMEM  [B, S] int32        (scalar prefetch)
                     word_hbm,           # ANY   [V, H]              (stays in HBM)
                     pos_ref,            # VMEM  (T, H)  position embeddings for this tile
                     tok_ref,            # VMEM  (1, H)  token-type row 0 (token_type_ids==0)
                     gamma_ref,          # VMEM  (1, H)  LayerNorm weight
                     beta_ref,           # VMEM  (1, H)  LayerNorm bias
                     out_ref,            # VMEM  (1, T, H) output tile
                     gather_buf,         # VMEM  (T, H)  scratch for gathered word rows
                     sem,                # DMA sems (T,)
                     *, tokens_per_block, eps):
    b = pl.program_id(0)
    j = pl.program_id(1)
    base = j * tokens_per_block

    # Issue all T row-gather DMAs, then wait for all of them.
    for t in range(tokens_per_block):
        tok_id = ids_ref[b, base + t]
        pltpu.make_async_copy(
            word_hbm.at[pl.ds(tok_id, 1)],      # (1, H) row of the word table
            gather_buf.at[pl.ds(t, 1)],         # (1, H) slot in the gather buffer
            sem.at[t],
        ).start()
    for t in range(tokens_per_block):
        pltpu.make_async_copy(
            word_hbm.at[pl.ds(0, 1)],           # shape-only descriptor for the wait
            gather_buf.at[pl.ds(t, 1)],
            sem.at[t],
        ).wait()

    # Sum of the three embeddings for this tile of tokens.
    x = gather_buf[...] + pos_ref[...] + tok_ref[...]          # (T, H) f32

    # LayerNorm over the hidden dim (PyTorch: biased variance, eps inside sqrt).
    mean = jnp.mean(x, axis=-1, keepdims=True)
    xc = x - mean
    var = jnp.mean(xc * xc, axis=-1, keepdims=True)
    inv = jax.lax.rsqrt(var + eps)                              # EUP, not VALU divide
    y = xc * inv * gamma_ref[...] + beta_ref[...]

    out_ref[0] = y.astype(out_ref.dtype)
    # Dropout(0.1) is identity in eval mode — nothing to do here.


def _pick_tokens_per_block(seq_len, max_tokens=64):
    """Largest tile T with T == seq_len or (T % 8 == 0 and T | seq_len), T <= max_tokens."""
    if seq_len <= max_tokens:
        return seq_len
    t = max_tokens - (max_tokens % 8)
    while t >= 8:
        if seq_len % t == 0:
            return t
        t -= 8
    return seq_len


def bert_embeddings(input_ids, params, *, eps=1e-12):
    """
    input_ids: [B, S] int32 token ids.
    params: dict with
      'word_embeddings'       [V, H]
      'position_embeddings'   [512, H]
      'token_type_embeddings' [2, H]
      'ln_weight', 'ln_bias'  [H]
    Returns embeddings [B, S, H] float32 (eval mode).
    """
    B, S = input_ids.shape
    word = params["word_embeddings"]
    H = word.shape[1]

    pos = params["position_embeddings"][:S]                  # [S, H]
    tok_row = params["token_type_embeddings"][0:1]           # [1, H] (token_type_ids are all 0)
    gamma = params["ln_weight"].reshape(1, H)
    beta = params["ln_bias"].reshape(1, H)

    T = _pick_tokens_per_block(S)
    ids = input_ids.astype(jnp.int32)

    kernel = functools.partial(_embed_ln_kernel, tokens_per_block=T, eps=eps)

    out = pl.pallas_call(
        kernel,
        out_shape=jax.ShapeDtypeStruct((B, S, H), word.dtype),
        grid_spec=pltpu.PrefetchScalarGridSpec(
            num_scalar_prefetch=1,                           # input_ids -> SMEM
            grid=(B, S // T),
            in_specs=[
                pl.BlockSpec(memory_space=pl.ANY),                     # word table (HBM)
                pl.BlockSpec((T, H), lambda b, j, ids: (j, 0)),        # position emb tile
                pl.BlockSpec((1, H), lambda b, j, ids: (0, 0)),        # token-type row 0
                pl.BlockSpec((1, H), lambda b, j, ids: (0, 0)),        # LN gamma
                pl.BlockSpec((1, H), lambda b, j, ids: (0, 0)),        # LN beta
            ],
            out_specs=pl.BlockSpec((1, T, H), lambda b, j, ids: (b, j, 0)),
            scratch_shapes=[
                pltpu.VMEM((T, H), word.dtype),              # gathered word rows
                pltpu.SemaphoreType.DMA((T,)),
            ],
        ),
        compiler_params=pltpu.CompilerParams(
            dimension_semantics=("parallel", "parallel")),
    )(ids, word, pos, tok_row, gamma, beta)
    return out


def _reference(input_ids, params, eps=1e-12):
    """Pure-JAX replica of the PyTorch forward (eval mode, input_ids path)."""
    B, S = input_ids.shape
    x = params["word_embeddings"][input_ids]
    x = x + params["position_embeddings"][:S][None, :, :]
    x = x + params["token_type_embeddings"][0][None, None, :]
    mean = x.mean(-1, keepdims=True)
    var = ((x - mean) ** 2).mean(-1, keepdims=True)
    y = (x - mean) / jnp.sqrt(var + eps)
    return y * params["ln_weight"] + params["ln_bias"]


if __name__ == "__main__":
    # Small BERT-like config: batch=2, seq=8, hidden=32, full 30522-entry vocab.
    B, S, H, V = 2, 8, 32, 30522

    key = jax.random.PRNGKey(0)
    k = jax.random.split(key, 6)

    word_tab = 0.02 * jax.random.normal(k[0], (V, H), jnp.float32)
    word_tab = word_tab.at[0].set(0.0)          # padding_idx=0 row is zero in PyTorch init
    pos_tab = 0.02 * jax.random.normal(k[1], (512, H), jnp.float32)
    tok_tab = 0.02 * jax.random.normal(k[2], (2, H), jnp.float32)
    ln_w = 1.0 + 0.1 * jax.random.normal(k[3], (H,), jnp.float32)
    ln_b = 0.1 * jax.random.normal(k[4], (H,), jnp.float32)

    params = {
        "word_embeddings": word_tab,
        "position_embeddings": pos_tab,
        "token_type_embeddings": tok_tab,
        "ln_weight": ln_w,
        "ln_bias": ln_b,
    }

    input_ids = jax.random.randint(k[5], (B, S), 0, V, dtype=jnp.int32)
    input_ids = input_ids.at[1, -2:].set(0)     # a couple of padding tokens

    out = bert_embeddings(input_ids, params)
    out = jax.block_until_ready(out)

    ref = _reference(input_ids, params)
    assert out.shape == (B, S, H)
    assert jnp.allclose(out, ref, atol=1e-4, rtol=1e-4)

    print("KERNEL_OK")
</pallas_src>

<mosaic_0001>
module attributes {stable_mosaic.version = 11 : i64} {
  func.func @_embed_ln_kernel(%arg0: i32, %arg1: i32, %arg2: memref<2x8xi32, #tpu.memory_space<smem>>, %arg3: memref<30522x32xf32, #tpu.memory_space<any>>, %arg4: memref<8x32xf32, #tpu.memory_space<vmem>>, %arg5: memref<1x32xf32, #tpu.memory_space<vmem>>, %arg6: memref<1x32xf32, #tpu.memory_space<vmem>>, %arg7: memref<1x32xf32, #tpu.memory_space<vmem>>, %arg8: memref<1x8x32xf32, #tpu.memory_space<vmem>>, %arg9: memref<8x32xf32, #tpu.memory_space<vmem>>, %arg10: memref<8x!tpu.dma_semaphore, #tpu.memory_space<semaphore_mem>>) attributes {dimension_semantics = [#tpu.dimension_semantics<parallel>, #tpu.dimension_semantics<parallel>], iteration_bounds = array<i64: 2, 1>, scalar_prefetch = 1 : i64, scratch_operands = 2 : i64, tpu.core_type = #tpu.core_type<tc>, window_params = [{}, {transform_indices = @transform_1, window_bounds = array<i64: 8, 32>}, {pipeline_mode = #tpu.pipeline_mode<synchronous>, transform_indices = @transform_2, window_bounds = array<i64: 1, 32>}, {pipeline_mode = #tpu.pipeline_mode<synchronous>, transform_indices = @transform_3, window_bounds = array<i64: 1, 32>}, {pipeline_mode = #tpu.pipeline_mode<synchronous>, transform_indices = @transform_4, window_bounds = array<i64: 1, 32>}, {transform_indices = @transform_5, window_bounds = array<i64: 1, 8, 32>}]} {
    %c8_i32 = arith.constant 8 : i32
    %0 = arith.muli %arg1, %c8_i32 : i32
    %c0_i32 = arith.constant 0 : i32
    %1 = arith.addi %0, %c0_i32 : i32
    %2 = arith.index_cast %arg0 : i32 to index
    %3 = arith.index_cast %1 : i32 to index
    %4 = memref.load %arg2[%2, %3] : memref<2x8xi32, #tpu.memory_space<smem>>
    %c0_i32_0 = arith.constant 0 : i32
    %c0_i32_1 = arith.constant 0 : i32
    %5 = tpu.memref_slice %arg3[%4, %c0_i32_1] : memref<30522x32xf32, #tpu.memory_space<any>> -> memref<1x32xf32, #tpu.memory_space<any>>
    %c0_i32_2 = arith.constant 0 : i32
    %c0_i32_3 = arith.constant 0 : i32
    %6 = tpu.memref_slice %arg9[%c0_i32_2, %c0_i32_3] : memref<8x32xf32, #tpu.memory_space<vmem>> -> memref<1x32xf32, #tpu.memory_space<vmem>>
    %7 = tpu.memref_slice %arg10[%c0_i32_0] : memref<8x!tpu.dma_semaphore, #tpu.memory_space<semaphore_mem>> -> memref<1x!tpu.dma_semaphore, #tpu.memory_space<semaphore_mem>>
    %8 = tpu.memref_squeeze %7 : memref<1x!tpu.dma_semaphore, #tpu.memory_space<semaphore_mem>> -> memref<!tpu.dma_semaphore, #tpu.memory_space<semaphore_mem>>
    tpu.enqueue_dma source(%5 : memref<1x32xf32, #tpu.memory_space<any>>) target(%6 : memref<1x32xf32, #tpu.memory_space<vmem>>) target_semaphore(%8 : memref<!tpu.dma_semaphore, #tpu.memory_space<semaphore_mem>>)
    %c1_i32 = arith.constant 1 : i32
    %9 = arith.addi %0, %c1_i32 : i32
    %10 = arith.index_cast %arg0 : i32 to index
    %11 = arith.index_cast %9 : i32 to index
    %12 = memref.load %arg2[%10, %11] : memref<2x8xi32, #tpu.memory_space<smem>>
    %c1_i32_4 = arith.constant 1 : i32
    %c0_i32_5 = arith.constant 0 : i32
    %13 = tpu.memref_slice %arg3[%12, %c0_i32_5] : memref<30522x32xf32, #tpu.memory_space<any>> -> memref<1x32xf32, #tpu.memory_space<any>>
    %c1_i32_6 = arith.constant 1 : i32
    %c0_i32_7 = arith.constant 0 : i32
    %14 = tpu.memref_slice %arg9[%c1_i32_6, %c0_i32_7] : memref<8x32xf32, #tpu.memory_space<vmem>> -> memref<1x32xf32, #tpu.memory_space<vmem>>
    %15 = tpu.memref_slice %arg10[%c1_i32_4] : memref<8x!tpu.dma_semaphore, #tpu.memory_space<semaphore_mem>> -> memref<1x!tpu.dma_semaphore, #tpu.memory_space<semaphore_mem>>
    %16 = tpu.memref_squeeze %15 : memref<1x!tpu.dma_semaphore, #tpu.memory_space<semaphore_mem>> -> memref<!tpu.dma_semaphore, #tpu.memory_space<semaphore_mem>>
    tpu.enqueue_dma source(%13 : memref<1x32xf32, #tpu.memory_space<any>>) target(%14 : memref<1x32xf32, #tpu.memory_space<vmem>>) target_semaphore(%16 : memref<!tpu.dma_semaphore, #tpu.memory_space<semaphore_mem>>)
    %c2_i32 = arith.constant 2 : i32
    %17 = arith.addi %0, %c2_i32 : i32
    %18 = arith.index_cast %arg0 : i32 to index
    %19 = arith.index_cast %17 : i32 to index
    %20 = memref.load %arg2[%18, %19] : memref<2x8xi32, #tpu.memory_space<smem>>
    %c2_i32_8 = arith.constant 2 : i32
    %c0_i32_9 = arith.constant 0 : i32
    %21 = tpu.memref_slice %arg3[%20, %c0_i32_9] : memref<30522x32xf32, #tpu.memory_space<any>> -> memref<1x32xf32, #tpu.memory_space<any>>
    %c2_i32_10 = arith.constant 2 : i32
    %c0_i32_11 = arith.constant 0 : i32
    %22 = tpu.memref_slice %arg9[%c2_i32_10, %c0_i32_11] : memref<8x32xf32, #tpu.memory_space<vmem>> -> memref<1x32xf32, #tpu.memory_space<vmem>>
    %23 = tpu.memref_slice %arg10[%c2_i32_8] : memref<8x!tpu.dma_semaphore, #tpu.memory_space<semaphore_mem>> -> memref<1x!tpu.dma_semaphore, #tpu.memory_space<semaphore_mem>>
    %24 = tpu.memref_squeeze %23 : memref<1x!tpu.dma_semaphore, #tpu.memory_space<semaphore_mem>> -> memref<!tpu.dma_semaphore, #tpu.memory_space<semaphore_mem>>
    tpu.enqueue_dma source(%21 : memref<1x32xf32, #tpu.memory_space<any>>) target(%22 : memref<1x32xf32, #tpu.memory_space<vmem>>) target_semaphore(%24 : memref<!tpu.dma_semaphore, #tpu.memory_space<semaphore_mem>>)
    %c3_i32 = arith.constant 3 : i32
    %25 = arith.addi %0, %c3_i32 : i32
    %26 = arith.index_cast %arg0 : i32 to index
    %27 = arith.index_cast %25 : i32 to index
    %28 = memref.load %arg2[%26, %27] : memref<2x8xi32, #tpu.memory_space<smem>>
    %c3_i32_12 = arith.constant 3 : i32
    %c0_i32_13 = arith.constant 0 : i32
    %29 = tpu.memref_slice %arg3[%28, %c0_i32_13] : memref<30522x32xf32, #tpu.memory_space<any>> -> memref<1x32xf32, #tpu.memory_space<any>>
    %c3_i32_14 = arith.constant 3 : i32
    %c0_i32_15 = arith.constant 0 : i32
    %30 = tpu.memref_slice %arg9[%c3_i32_14, %c0_i32_15] : memref<8x32xf32, #tpu.memory_space<vmem>> -> memref<1x32xf32, #tpu.memory_space<vmem>>
    %31 = tpu.memref_slice %arg10[%c3_i32_12] : memref<8x!tpu.dma_semaphore, #tpu.memory_space<semaphore_mem>> -> memref<1x!tpu.dma_semaphore, #tpu.memory_space<semaphore_mem>>
    %32 = tpu.memref_squeeze %31 : memref<1x!tpu.dma_semaphore, #tpu.memory_space<semaphore_mem>> -> memref<!tpu.dma_semaphore, #tpu.memory_space<semaphore_mem>>
    tpu.enqueue_dma source(%29 : memref<1x32xf32, #tpu.memory_space<any>>) target(%30 : memref<1x32xf32, #tpu.memory_space<vmem>>) target_semaphore(%32 : memref<!tpu.dma_semaphore, #tpu.memory_space<semaphore_mem>>)
    %c4_i32 = arith.constant 4 : i32
    %33 = arith.addi %0, %c4_i32 : i32
    %34 = arith.index_cast %arg0 : i32 to index
    %35 = arith.index_cast %33 : i32 to index
    %36 = memref.load %arg2[%34, %35] : memref<2x8xi32, #tpu.memory_space<smem>>
    %c4_i32_16 = arith.constant 4 : i32
    %c0_i32_17 = arith.constant 0 : i32
    %37 = tpu.memref_slice %arg3[%36, %c0_i32_17] : memref<30522x32xf32, #tpu.memory_space<any>> -> memref<1x32xf32, #tpu.memory_space<any>>
    %c4_i32_18 = arith.constant 4 : i32
    %c0_i32_19 = arith.constant 0 : i32
    %38 = tpu.memref_slice %arg9[%c4_i32_18, %c0_i32_19] : memref<8x32xf32, #tpu.memory_space<vmem>> -> memref<1x32xf32, #tpu.memory_space<vmem>>
    %39 = tpu.memref_slice %arg10[%c4_i32_16] : memref<8x!tpu.dma_semaphore, #tpu.memory_space<semaphore_mem>> -> memref<1x!tpu.dma_semaphore, #tpu.memory_space<semaphore_mem>>
    %40 = tpu.memref_squeeze %39 : memref<1x!tpu.dma_semaphore, #tpu.memory_space<semaphore_mem>> -> memref<!tpu.dma_semaphore, #tpu.memory_space<semaphore_mem>>
    tpu.enqueue_dma source(%37 : memref<1x32xf32, #tpu.memory_space<any>>) target(%38 : memref<1x32xf32, #tpu.memory_space<vmem>>) target_semaphore(%40 : memref<!tpu.dma_semaphore, #tpu.memory_space<semaphore_mem>>)
    %c5_i32 = arith.constant 5 : i32
    %41 = arith.addi %0, %c5_i32 : i32
    %42 = arith.index_cast %arg0 : i32 to index
    %43 = arith.index_cast %41 : i32 to index
    %44 = memref.load %arg2[%42, %43] : memref<2x8xi32, #tpu.memory_space<smem>>
    %c5_i32_20 = arith.constant 5 : i32
    %c0_i32_21 = arith.constant 0 : i32
    %45 = tpu.memref_slice %arg3[%44, %c0_i32_21] : memref<30522x32xf32, #tpu.memory_space<any>> -> memref<1x32xf32, #tpu.memory_space<any>>
    %c5_i32_22 = arith.constant 5 : i32
    %c0_i32_23 = arith.constant 0 : i32
    %46 = tpu.memref_slice %arg9[%c5_i32_22, %c0_i32_23] : memref<8x32xf32, #tpu.memory_space<vmem>> -> memref<1x32xf32, #tpu.memory_space<vmem>>
    %47 = tpu.memref_slice %arg10[%c5_i32_20] : memref<8x!tpu.dma_semaphore, #tpu.memory_space<semaphore_mem>> -> memref<1x!tpu.dma_semaphore, #tpu.memory_space<semaphore_mem>>
    %48 = tpu.memref_squeeze %47 : memref<1x!tpu.dma_semaphore, #tpu.memory_space<semaphore_mem>> -> memref<!tpu.dma_semaphore, #tpu.memory_space<semaphore_mem>>
    tpu.enqueue_dma source(%45 : memref<1x32xf32, #tpu.memory_space<any>>) target(%46 : memref<1x32xf32, #tpu.memory_space<vmem>>) target_semaphore(%48 : memref<!tpu.dma_semaphore, #tpu.memory_space<semaphore_mem>>)
    %c6_i32 = arith.constant 6 : i32
    %49 = arith.addi %0, %c6_i32 : i32
    %50 = arith.index_cast %arg0 : i32 to index
    %51 = arith.index_cast %49 : i32 to index
    %52 = memref.load %arg2[%50, %51] : memref<2x8xi32, #tpu.memory_space<smem>>
    %c6_i32_24 = arith.constant 6 : i32
    %c0_i32_25 = arith.constant 0 : i32
    %53 = tpu.memref_slice %arg3[%52, %c0_i32_25] : memref<30522x32xf32, #tpu.memory_space<any>> -> memref<1x32xf32, #tpu.memory_space<any>>
    %c6_i32_26 = arith.constant 6 : i32
    %c0_i32_27 = arith.constant 0 : i32
    %54 = tpu.memref_slice %arg9[%c6_i32_26, %c0_i32_27] : memref<8x32xf32, #tpu.memory_space<vmem>> -> memref<1x32xf32, #tpu.memory_space<vmem>>
    %55 = tpu.memref_slice %arg10[%c6_i32_24] : memref<8x!tpu.dma_semaphore, #tpu.memory_space<semaphore_mem>> -> memref<1x!tpu.dma_semaphore, #tpu.memory_space<semaphore_mem>>
    %56 = tpu.memref_squeeze %55 : memref<1x!tpu.dma_semaphore, #tpu.memory_space<semaphore_mem>> -> memref<!tpu.dma_semaphore, #tpu.memory_space<semaphore_mem>>
    tpu.enqueue_dma source(%53 : memref<1x32xf32, #tpu.memory_space<any>>) target(%54 : memref<1x32xf32, #tpu.memory_space<vmem>>) target_semaphore(%56 : memref<!tpu.dma_semaphore, #tpu.memory_space<semaphore_mem>>)
    %c7_i32 = arith.constant 7 : i32
    %57 = arith.addi %0, %c7_i32 : i32
    %58 = arith.index_cast %arg0 : i32 to index
    %59 = arith.index_cast %57 : i32 to index
    %60 = memref.load %arg2[%58, %59] : memref<2x8xi32, #tpu.memory_space<smem>>
    %c7_i32_28 = arith.constant 7 : i32
    %c0_i32_29 = arith.constant 0 : i32
    %61 = tpu.memref_slice %arg3[%60, %c0_i32_29] : memref<30522x32xf32, #tpu.memory_space<any>> -> memref<1x32xf32, #tpu.memory_space<any>>
    %c7_i32_30 = arith.constant 7 : i32
    %c0_i32_31 = arith.constant 0 : i32
    %62 = tpu.memref_slice %arg9[%c7_i32_30, %c0_i32_31] : memref<8x32xf32, #tpu.memory_space<vmem>> -> memref<1x32xf32, #tpu.memory_space<vmem>>
    %63 = tpu.memref_slice %arg10[%c7_i32_28] : memref<8x!tpu.dma_semaphore, #tpu.memory_space<semaphore_mem>> -> memref<1x!tpu.dma_semaphore, #tpu.memory_space<semaphore_mem>>
    %64 = tpu.memref_squeeze %63 : memref<1x!tpu.dma_semaphore, #tpu.memory_space<semaphore_mem>> -> memref<!tpu.dma_semaphore, #tpu.memory_space<semaphore_mem>>
    tpu.enqueue_dma source(%61 : memref<1x32xf32, #tpu.memory_space<any>>) target(%62 : memref<1x32xf32, #tpu.memory_space<vmem>>) target_semaphore(%64 : memref<!tpu.dma_semaphore, #tpu.memory_space<semaphore_mem>>)
    %c0_i32_32 = arith.constant 0 : i32
    %c0_i32_33 = arith.constant 0 : i32
    %c0_i32_34 = arith.constant 0 : i32
    %65 = tpu.memref_slice %arg3[%c0_i32_33, %c0_i32_34] : memref<30522x32xf32, #tpu.memory_space<any>> -> memref<1x32xf32, #tpu.memory_space<any>>
    %c0_i32_35 = arith.constant 0 : i32
    %c0_i32_36 = arith.constant 0 : i32
    %66 = tpu.memref_slice %arg9[%c0_i32_35, %c0_i32_36] : memref<8x32xf32, #tpu.memory_space<vmem>> -> memref<1x32xf32, #tpu.memory_space<vmem>>
    %67 = tpu.memref_slice %arg10[%c0_i32_32] : memref<8x!tpu.dma_semaphore, #tpu.memory_space<semaphore_mem>> -> memref<1x!tpu.dma_semaphore, #tpu.memory_space<semaphore_mem>>
    %68 = tpu.memref_squeeze %67 : memref<1x!tpu.dma_semaphore, #tpu.memory_space<semaphore_mem>> -> memref<!tpu.dma_semaphore, #tpu.memory_space<semaphore_mem>>
    tpu.wait_dma2 semaphore(%68 : memref<!tpu.dma_semaphore, #tpu.memory_space<semaphore_mem>>) src(%65 : memref<1x32xf32, #tpu.memory_space<any>>) dst(%66 : memref<1x32xf32, #tpu.memory_space<vmem>>)
    %c1_i32_37 = arith.constant 1 : i32
    %c0_i32_38 = arith.constant 0 : i32
    %c0_i32_39 = arith.constant 0 : i32
    %69 = tpu.memref_slice %arg3[%c0_i32_38, %c0_i32_39] : memref<30522x32xf32, #tpu.memory_space<any>> -> memref<1x32xf32, #tpu.memory_space<any>>
    %c1_i32_40 = arith.constant 1 : i32
    %c0_i32_41 = arith.constant 0 : i32
    %70 = tpu.memref_slice %arg9[%c1_i32_40, %c0_i32_41] : memref<8x32xf32, #tpu.memory_space<vmem>> -> memref<1x32xf32, #tpu.memory_space<vmem>>
    %71 = tpu.memref_slice %arg10[%c1_i32_37] : memref<8x!tpu.dma_semaphore, #tpu.memory_space<semaphore_mem>> -> memref<1x!tpu.dma_semaphore, #tpu.memory_space<semaphore_mem>>
    %72 = tpu.memref_squeeze %71 : memref<1x!tpu.dma_semaphore, #tpu.memory_space<semaphore_mem>> -> memref<!tpu.dma_semaphore, #tpu.memory_space<semaphore_mem>>
    tpu.wait_dma2 semaphore(%72 : memref<!tpu.dma_semaphore, #tpu.memory_space<semaphore_mem>>) src(%69 : memref<1x32xf32, #tpu.memory_space<any>>) dst(%70 : memref<1x32xf32, #tpu.memory_space<vmem>>)
    %c2_i32_42 = arith.constant 2 : i32
    %c0_i32_43 = arith.constant 0 : i32
    %c0_i32_44 = arith.constant 0 : i32
    %73 = tpu.memref_slice %arg3[%c0_i32_43, %c0_i32_44] : memref<30522x32xf32, #tpu.memory_space<any>> -> memref<1x32xf32, #tpu.memory_space<any>>
    %c2_i32_45 = arith.constant 2 : i32
    %c0_i32_46 = arith.constant 0 : i32
    %74 = tpu.memref_slice %arg9[%c2_i32_45, %c0_i32_46] : memref<8x32xf32, #tpu.memory_space<vmem>> -> memref<1x32xf32, #tpu.memory_space<vmem>>
    %75 = tpu.memref_slice %arg10[%c2_i32_42] : memref<8x!tpu.dma_semaphore, #tpu.memory_space<semaphore_mem>> -> memref<1x!tpu.dma_semaphore, #tpu.memory_space<semaphore_mem>>
    %76 = tpu.memref_squeeze %75 : memref<1x!tpu.dma_semaphore, #tpu.memory_space<semaphore_mem>> -> memref<!tpu.dma_semaphore, #tpu.memory_space<semaphore_mem>>
    tpu.wait_dma2 semaphore(%76 : memref<!tpu.dma_semaphore, #tpu.memory_space<semaphore_mem>>) src(%73 : memref<1x32xf32, #tpu.memory_space<any>>) dst(%74 : memref<1x32xf32, #tpu.memory_space<vmem>>)
    %c3_i32_47 = arith.constant 3 : i32
    %c0_i32_48 = arith.constant 0 : i32
    %c0_i32_49 = arith.constant 0 : i32
    %77 = tpu.memref_slice %arg3[%c0_i32_48, %c0_i32_49] : memref<30522x32xf32, #tpu.memory_space<any>> -> memref<1x32xf32, #tpu.memory_space<any>>
    %c3_i32_50 = arith.constant 3 : i32
    %c0_i32_51 = arith.constant 0 : i32
    %78 = tpu.memref_slice %arg9[%c3_i32_50, %c0_i32_51] : memref<8x32xf32, #tpu.memory_space<vmem>> -> memref<1x32xf32, #tpu.memory_space<vmem>>
    %79 = tpu.memref_slice %arg10[%c3_i32_47] : memref<8x!tpu.dma_semaphore, #tpu.memory_space<semaphore_mem>> -> memref<1x!tpu.dma_semaphore, #tpu.memory_space<semaphore_mem>>
    %80 = tpu.memref_squeeze %79 : memref<1x!tpu.dma_semaphore, #tpu.memory_space<semaphore_mem>> -> memref<!tpu.dma_semaphore, #tpu.memory_space<semaphore_mem>>
    tpu.wait_dma2 semaphore(%80 : memref<!tpu.dma_semaphore, #tpu.memory_space<semaphore_mem>>) src(%77 : memref<1x32xf32, #tpu.memory_space<any>>) dst(%78 : memref<1x32xf32, #tpu.memory_space<vmem>>)
    %c4_i32_52 = arith.constant 4 : i32
    %c0_i32_53 = arith.constant 0 : i32
    %c0_i32_54 = arith.constant 0 : i32
    %81 = tpu.memref_slice %arg3[%c0_i32_53, %c0_i32_54] : memref<30522x32xf32, #tpu.memory_space<any>> -> memref<1x32xf32, #tpu.memory_space<any>>
    %c4_i32_55 = arith.constant 4 : i32
    %c0_i32_56 = arith.constant 0 : i32
    %82 = tpu.memref_slice %arg9[%c4_i32_55, %c0_i32_56] : memref<8x32xf32, #tpu.memory_space<vmem>> -> memref<1x32xf32, #tpu.memory_space<vmem>>
    %83 = tpu.memref_slice %arg10[%c4_i32_52] : memref<8x!tpu.dma_semaphore, #tpu.memory_space<semaphore_mem>> -> memref<1x!tpu.dma_semaphore, #tpu.memory_space<semaphore_mem>>
    %84 = tpu.memref_squeeze %83 : memref<1x!tpu.dma_semaphore, #tpu.memory_space<semaphore_mem>> -> memref<!tpu.dma_semaphore, #tpu.memory_space<semaphore_mem>>
    tpu.wait_dma2 semaphore(%84 : memref<!tpu.dma_semaphore, #tpu.memory_space<semaphore_mem>>) src(%81 : memref<1x32xf32, #tpu.memory_space<any>>) dst(%82 : memref<1x32xf32, #tpu.memory_space<vmem>>)
    %c5_i32_57 = arith.constant 5 : i32
    %c0_i32_58 = arith.constant 0 : i32
    %c0_i32_59 = arith.constant 0 : i32
    %85 = tpu.memref_slice %arg3[%c0_i32_58, %c0_i32_59] : memref<30522x32xf32, #tpu.memory_space<any>> -> memref<1x32xf32, #tpu.memory_space<any>>
    %c5_i32_60 = arith.constant 5 : i32
    %c0_i32_61 = arith.constant 0 : i32
    %86 = tpu.memref_slice %arg9[%c5_i32_60, %c0_i32_61] : memref<8x32xf32, #tpu.memory_space<vmem>> -> memref<1x32xf32, #tpu.memory_space<vmem>>
    %87 = tpu.memref_slice %arg10[%c5_i32_57] : memref<8x!tpu.dma_semaphore, #tpu.memory_space<semaphore_mem>> -> memref<1x!tpu.dma_semaphore, #tpu.memory_space<semaphore_mem>>
    %88 = tpu.memref_squeeze %87 : memref<1x!tpu.dma_semaphore, #tpu.memory_space<semaphore_mem>> -> memref<!tpu.dma_semaphore, #tpu.memory_space<semaphore_mem>>
    tpu.wait_dma2 semaphore(%88 : memref<!tpu.dma_semaphore, #tpu.memory_space<semaphore_mem>>) src(%85 : memref<1x32xf32, #tpu.memory_space<any>>) dst(%86 : memref<1x32xf32, #tpu.memory_space<vmem>>)
    %c6_i32_62 = arith.constant 6 : i32
    %c0_i32_63 = arith.constant 0 : i32
    %c0_i32_64 = arith.constant 0 : i32
    %89 = tpu.memref_slice %arg3[%c0_i32_63, %c0_i32_64] : memref<30522x32xf32, #tpu.memory_space<any>> -> memref<1x32xf32, #tpu.memory_space<any>>
    %c6_i32_65 = arith.constant 6 : i32
    %c0_i32_66 = arith.constant 0 : i32
    %90 = tpu.memref_slice %arg9[%c6_i32_65, %c0_i32_66] : memref<8x32xf32, #tpu.memory_space<vmem>> -> memref<1x32xf32, #tpu.memory_space<vmem>>
    %91 = tpu.memref_slice %arg10[%c6_i32_62] : memref<8x!tpu.dma_semaphore, #tpu.memory_space<semaphore_mem>> -> memref<1x!tpu.dma_semaphore, #tpu.memory_space<semaphore_mem>>
    %92 = tpu.memref_squeeze %91 : memref<1x!tpu.dma_semaphore, #tpu.memory_space<semaphore_mem>> -> memref<!tpu.dma_semaphore, #tpu.memory_space<semaphore_mem>>
    tpu.wait_dma2 semaphore(%92 : memref<!tpu.dma_semaphore, #tpu.memory_space<semaphore_mem>>) src(%89 : memref<1x32xf32, #tpu.memory_space<any>>) dst(%90 : memref<1x32xf32, #tpu.memory_space<vmem>>)
    %c7_i32_67 = arith.constant 7 : i32
    %c0_i32_68 = arith.constant 0 : i32
    %c0_i32_69 = arith.constant 0 : i32
    %93 = tpu.memref_slice %arg3[%c0_i32_68, %c0_i32_69] : memref<30522x32xf32, #tpu.memory_space<any>> -> memref<1x32xf32, #tpu.memory_space<any>>
    %c7_i32_70 = arith.constant 7 : i32
    %c0_i32_71 = arith.constant 0 : i32
    %94 = tpu.memref_slice %arg9[%c7_i32_70, %c0_i32_71] : memref<8x32xf32, #tpu.memory_space<vmem>> -> memref<1x32xf32, #tpu.memory_space<vmem>>
    %95 = tpu.memref_slice %arg10[%c7_i32_67] : memref<8x!tpu.dma_semaphore, #tpu.memory_space<semaphore_mem>> -> memref<1x!tpu.dma_semaphore, #tpu.memory_space<semaphore_mem>>
    %96 = tpu.memref_squeeze %95 : memref<1x!tpu.dma_semaphore, #tpu.memory_space<semaphore_mem>> -> memref<!tpu.dma_semaphore, #tpu.memory_space<semaphore_mem>>
    tpu.wait_dma2 semaphore(%96 : memref<!tpu.dma_semaphore, #tpu.memory_space<semaphore_mem>>) src(%93 : memref<1x32xf32, #tpu.memory_space<any>>) dst(%94 : memref<1x32xf32, #tpu.memory_space<vmem>>)
    %c0 = arith.constant 0 : index
    %c0_72 = arith.constant 0 : index
    %97 = vector.load %arg9[%c0, %c0_72] : memref<8x32xf32, #tpu.memory_space<vmem>>, vector<8x32xf32>
    %c0_73 = arith.constant 0 : index
    %c0_74 = arith.constant 0 : index
    %98 = vector.load %arg4[%c0_73, %c0_74] : memref<8x32xf32, #tpu.memory_space<vmem>>, vector<8x32xf32>
    %99 = arith.addf %97, %98 : vector<8x32xf32>
    %c0_75 = arith.constant 0 : index
    %c0_76 = arith.constant 0 : index
    %100 = vector.load %arg5[%c0_75, %c0_76] : memref<1x32xf32, #tpu.memory_space<vmem>>, vector<1x32xf32>
    %101 = vector.broadcast %100 : vector<1x32xf32> to vector<8x32xf32>
    %102 = arith.addf %99, %101 : vector<8x32xf32>
    %cst = arith.constant dense<0.000000e+00> : vector<8xf32>
    %103 = vector.multi_reduction <add>, %102, %cst [1] : vector<8x32xf32> to vector<8xf32>
    %104 = vector.shape_cast %103 : vector<8xf32> to vector<8x1xf32>
    %cst_77 = arith.constant 3.200000e+01 : f32
    %105 = vector.broadcast %cst_77 : f32 to vector<8x1xf32>
    %106 = arith.divf %104, %105 : vector<8x1xf32>
    %107 = vector.broadcast %106 : vector<8x1xf32> to vector<8x32xf32>
    %108 = arith.subf %102, %107 : vector<8x32xf32>
    %109 = arith.mulf %108, %108 : vector<8x32xf32>
    %cst_78 = arith.constant dense<0.000000e+00> : vector<8xf32>
    %110 = vector.multi_reduction <add>, %109, %cst_78 [1] : vector<8x32xf32> to vector<8xf32>
    %111 = vector.shape_cast %110 : vector<8xf32> to vector<8x1xf32>
    %cst_79 = arith.constant 3.200000e+01 : f32
    %112 = vector.broadcast %cst_79 : f32 to vector<8x1xf32>
    %113 = arith.divf %111, %112 : vector<8x1xf32>
    %cst_80 = arith.constant 9.99999996E-13 : f32
    %114 = vector.broadcast %cst_80 : f32 to vector<8x1xf32>
    %115 = arith.addf %113, %114 : vector<8x1xf32>
    %116 = math.rsqrt %115 : vector<8x1xf32>
    %117 = vector.broadcast %116 : vector<8x1xf32> to vector<8x32xf32>
    %118 = arith.mulf %108, %117 : vector<8x32xf32>
    %c0_81 = arith.constant 0 : index
    %c0_82 = arith.constant 0 : index
    %119 = vector.load %arg6[%c0_81, %c0_82] : memref<1x32xf32, #tpu.memory_space<vmem>>, vector<1x32xf32>
    %120 = vector.broadcast %119 : vector<1x32xf32> to vector<8x32xf32>
    %121 = arith.mulf %118, %120 : vector<8x32xf32>
    %c0_83 = arith.constant 0 : index
    %c0_84 = arith.constant 0 : index
    %122 = vector.load %arg7[%c0_83, %c0_84] : memref<1x32xf32, #tpu.memory_space<vmem>>, vector<1x32xf32>
    %123 = vector.broadcast %122 : vector<1x32xf32> to vector<8x32xf32>
    %124 = arith.addf %121, %123 : vector<8x32xf32>
    %c0_85 = arith.constant 0 : index
    %c0_86 = arith.constant 0 : index
    %c0_87 = arith.constant 0 : index
    %125 = vector.load %arg8[%c0_85, %c0_86, %c0_87] : memref<1x8x32xf32, #tpu.memory_space<vmem>>, vector<1x8x32xf32>
    %126 = vector.shape_cast %125 : vector<1x8x32xf32> to vector<8x32xf32>
    %127 = vector.shape_cast %124 : vector<8x32xf32> to vector<1x8x32xf32>
    tpu.vector_store %arg8[%c0_85, %c0_86, %c0_87], %127 {strides = array<i32>} : memref<1x8x32xf32, #tpu.memory_space<vmem>>, vector<1x8x32xf32>,
    return
  }
  func.func @transform_1(%arg0: i32, %arg1: i32, %arg2: memref<2x8xi32, #tpu.memory_space<smem>>) -> (i32, i32) {
    %c0_i32 = arith.constant 0 : i32
    %c0_i32_0 = arith.constant 0 : i32
    return %arg1, %c0_i32 : i32, i32
  }
  func.func @transform_2(%arg0: i32, %arg1: i32, %arg2: memref<2x8xi32, #tpu.memory_space<smem>>) -> (i32, i32) {
    %c0_i32 = arith.constant 0 : i32
    %c0_i32_0 = arith.constant 0 : i32
    %c0_i32_1 = arith.constant 0 : i32
    return %c0_i32, %c0_i32_0 : i32, i32
  }
  func.func @transform_3(%arg0: i32, %arg1: i32, %arg2: memref<2x8xi32, #tpu.memory_space<smem>>) -> (i32, i32) {
    %c0_i32 = arith.constant 0 : i32
    %c0_i32_0 = arith.constant 0 : i32
    %c0_i32_1 = arith.constant 0 : i32
    return %c0_i32, %c0_i32_0 : i32, i32
  }
  func.func @transform_4(%arg0: i32, %arg1: i32, %arg2: memref<2x8xi32, #tpu.memory_space<smem>>) -> (i32, i32) {
    %c0_i32 = arith.constant 0 : i32
    %c0_i32_0 = arith.constant 0 : i32
    %c0_i32_1 = arith.constant 0 : i32
    return %c0_i32, %c0_i32_0 : i32, i32
  }
  func.func @transform_5(%arg0: i32, %arg1: i32, %arg2: memref<2x8xi32, #tpu.memory_space<smem>>) -> (i32, i32, i32) {
    %c0_i32 = arith.constant 0 : i32
    %c0_i32_0 = arith.constant 0 : i32
    return %arg0, %arg1, %c0_i32 : i32, i32, i32
  }
}

</mosaic_0001>

<llo_original>
// kernel: tpu_custom_call.1
$region0: #{tpu_custom_call.1}
  #allocation0 [shape = 'u32[]', space=smem, size = 0x4, offset = 0x4, fixed_abs, tag = 'smem constant byte address 0x4 - core index']
  #allocation1 [shape = 'u32[144,128]{1,0:T(1,128)}', space=vmem, size = 0x12000, scoped, tag = 'internal scratch']
  #allocation2 [shape = 'f32[8,32]{1,0:T(8,128)}', space=vmem, size = 0x1000, scoped, tag = 'scratch operand']
  #allocation3 [shape = 's32[8]{0}', space=sflag, size = 0x20, scoped, tag = 'scratch operand']
  #allocation4 [shape = 's32[1]{0}', space=sflag, size = 0x4, scoped, tag = 'scoped memory for tpu_custom_call.1']
  #allocation5 [shape = 'u8[1024]{0}', space=smem, size = 0x400, scoped, tag = 'prefetched SMEM operand 0']
  #allocation8 [shape = 's32[]', space=sflag, size = 0x4, offset = 0, fixed_abs, tag = 'sflag constant byte address 0x0 - dummy sync flag']
  #allocation9 [shape = 's32[]', space=sflag, size = 0x4, offset = 0, fixed_abs, tag = 'sflag constant byte address 0x0 - dummy sync flag']
  #allocation10 [shape = 's32[]', space=sflag, size = 0x4, offset = 0, fixed_abs, tag = 'sflag constant byte address 0x0 - dummy sync flag']
  #allocation11 [shape = 's32[]', space=sflag, size = 0x4, offset = 0, fixed_abs, tag = 'sflag constant byte address 0x0 - dummy sync flag']
  #allocation12 [shape = 's32[]', space=sflag, size = 0x4, offset = 0, fixed_abs, tag = 'sflag constant byte address 0x0 - dummy sync flag']
  #allocation13 [shape = 's32[]', space=sflag, size = 0x4, offset = 0, fixed_abs, tag = 'sflag constant byte address 0x0 - dummy sync flag']
  #allocation14 [shape = 's32[]', space=sflag, size = 0x4, offset = 0, fixed_abs, tag = 'sflag constant byte address 0x0 - dummy sync flag']
  #allocation15 [shape = 's32[]', space=sflag, size = 0x4, offset = 0, fixed_abs, tag = 'sflag constant byte address 0x0 - dummy sync flag']
  %s0 = inlined_call_operand.vmem [shape: s32[2,8], index: 0, kind: input, shape index: {}]
  %s1 = inlined_call_operand.vmem [shape: f32[30522,32], index: 1, kind: input, shape index: {}]
  %s2 = inlined_call_operand.vmem [shape: f32[8,32], index: 2, kind: input, shape index: {}]
  %s3 = inlined_call_operand.vmem [shape: f32[1,32], index: 3, kind: input, shape index: {}]
  %s4 = inlined_call_operand.vmem [shape: f32[1,32], index: 4, kind: input, shape index: {}]
  %s5 = inlined_call_operand.vmem [shape: f32[1,32], index: 5, kind: input, shape index: {}]
  %s6 = inlined_call_operand.hbm [shape: f32[2,8,32], index: 6, kind: output, shape index: {}]
  %s7 = sld [smem:[#allocation0]]
  $region289: #{tpu_custom_call.1} parent=0
    _
  %s9 = ssub.s32 1, %s7
  %s10 = scalar_select 0, %s9, %s7
  %s11 = sshll.u32 %s0, 4
  %s12 = int_to_ptr.vmem [resolvable:$true] %s11
  %14 = dma.vmem_to_smem %s12, 32, [#allocation5], [#allocation4]
  %15 = dma.done [#allocation4], 32
  %16 = sfence
  $region1: #{tpu_custom_call.1} parent=0
    #allocation6 [shape = 'u8[8192]{0}', space=vmem, size = 0x2000, scoped, tag = 'output window, operand 0']
    #allocation7 [shape = 's32[2]{0}', space=sflag, size = 0x8, scoped, tag = 'scoped memory for tpu_custom_call.1']
    %17 = vsyncpa [#allocation7], 0
    %s18 = scalar_lea.sflag [#allocation7], 1
    %19 = vsyncpa %s18, 0
    loop: start=0, step=1, limit=4
    $region2: #{tpu_custom_call.1} parent=1 // loop_pre_header
      _
    $region3: #{tpu_custom_call.1} parent=1 // loop_header
      %s21 = sphi 0, %s25
      %p22 = scmp.ge.s32.totalorder %s21, 4
      %s28 = sphi 0, %s40
      %s29 = sphi 0, %s36
      %s30 = sphi 0, %s28
      %s31 = sphi 0, %s29
      %s32 = sphi 0, %s30
      %s33 = sphi 0, %s31
      %s43 = sphi 0, %s45
      %s46 = sphi 0, %s43
      %s47 = sphi 0, %s46
      %s63 = sphi 0, %s47
      %s67 = sphi 0, %s67
      %s69 = sphi 0, %s67
      %s70 = sphi 0, %s69
      %s84 = sphi 0, %s70
      %s88 = sphi 0, %s88
      %s90 = sphi 0, %s88
      %s91 = sphi 0, %s90
      %s105 = sphi 0, %s91
      %s109 = sphi 0, %s109
      %s111 = sphi 0, %s109
      %s112 = sphi 0, %s111
      %s126 = sphi 0, %s112
      %s134 = sphi 0, %s136
      %s137 = sphi 0, %s134
      %s138 = sphi 0, %s137
      %s154 = sphi 0, %s138
    $region4: #{tpu_custom_call.1} parent=1 // loop_header_branch
      %24 = sbr.rel (%p22) target = $region8
    $region5: #{tpu_custom_call.1} parent=1 // loop_body
      %s26 = ssub.s32 %s21, 1
      %s27 = ssub.s32 %s21, 2
      %s34 = sadd.s32 1, %s29
      %p35 = scmp.ge.s32.totalorder %s34, 1
      %s36 = scalar_select %p35, 0, %s34
      %s37 = sadd.s32 1, %s28
      %s38 = scalar_select %p35, %s37, %s28
      %p39 = scmp.ge.s32.totalorder %s38, 2
      %s40 = scalar_select %p39, 0, %s38
      %s41 = ssub.s32 %s29, %s36
      %p42 = scmp.eq.s32.totalorder %s41, 0
      %s44 = sadd.s32 %s43, 1
      %s45 = scalar_select %p42, %s43, %s44
      %p48 = pneg %p42
      %p49 = scmp.eq.s32.totalorder %s21, 1
      %p50 = por %p48, %p49
      %p51 = scmp.ne.s32.totalorder %s43, %s46
      %p52 = scmp.eq.s32.totalorder %s21, 0
      %p53 = por %p51, %p52
      %p54 = scmp.ne.s32.totalorder %s43, %s46
      %p55 = scmp.eq.s32.totalorder %s26, 1
      %p56 = por %p54, %p55
      %p57 = scmp.ne.s32.totalorder %s46, %s47
      %p58 = scmp.eq.s32.totalorder %s26, 0
      %p59 = por %p57, %p58
      %p60 = scmp.ne.s32.totalorder %s46, %s47
      %p61 = scmp.eq.s32.totalorder %s27, 1
      %p62 = por %p60, %p61
      %p64 = scmp.ne.s32.totalorder %s47, %s63
      %p65 = scmp.eq.s32.totalorder %s27, 0
      %p66 = por %p64, %p65
      %s68 = sadd.s32 %s67, 1
      %p71 = scmp.eq.s32.totalorder %s21, 1
      %p72 = scmp.ne.s32.totalorder %s67, %s69
      %p73 = scmp.eq.s32.totalorder %s21, 0
      %p74 = por %p72, %p73
      %p75 = scmp.ne.s32.totalorder %s67, %s69
      %p76 = scmp.eq.s32.totalorder %s26, 1
      %p77 = por %p75, %p76
      %p78 = scmp.ne.s32.totalorder %s69, %s70
      %p79 = scmp.eq.s32.totalorder %s26, 0
      %p80 = por %p78, %p79
      %p81 = scmp.ne.s32.totalorder %s69, %s70
      %p82 = scmp.eq.s32.totalorder %s27, 1
      %p83 = por %p81, %p82
      %p85 = scmp.ne.s32.totalorder %s70, %s84
      %p86 = scmp.eq.s32.totalorder %s27, 0
      %p87 = por %p85, %p86
      %s89 = sadd.s32 %s88, 1
      %p92 = scmp.eq.s32.totalorder %s21, 1
      %p93 = scmp.ne.s32.totalorder %s88, %s90
      %p94 = scmp.eq.s32.totalorder %s21, 0
      %p95 = por %p93, %p94
      %p96 = scmp.ne.s32.totalorder %s88, %s90
      %p97 = scmp.eq.s32.totalorder %s26, 1
      %p98 = por %p96, %p97
      %p99 = scmp.ne.s32.totalorder %s90, %s91
      %p100 = scmp.eq.s32.totalorder %s26, 0
      %p101 = por %p99, %p100
      %p102 = scmp.ne.s32.totalorder %s90, %s91
      %p103 = scmp.eq.s32.totalorder %s27, 1
      %p104 = por %p102, %p103
      %p106 = scmp.ne.s32.totalorder %s91, %s105
      %p107 = scmp.eq.s32.totalorder %s27, 0
      %p108 = por %p106, %p107
      %s110 = sadd.s32 %s109, 1
      %p113 = scmp.eq.s32.totalorder %s21, 1
      %p114 = scmp.ne.s32.totalorder %s109, %s111
      %p115 = scmp.eq.s32.totalorder %s21, 0
      %p116 = por %p114, %p115
      %p117 = scmp.ne.s32.totalorder %s109, %s111
      %p118 = scmp.eq.s32.totalorder %s26, 1
      %p119 = por %p117, %p118
      %p120 = scmp.ne.s32.totalorder %s111, %s112
      %p121 = scmp.eq.s32.totalorder %s26, 0
      %p122 = por %p120, %p121
      %p123 = scmp.ne.s32.totalorder %s111, %s112
      %p124 = scmp.eq.s32.totalorder %s27, 1
      %p125 = por %p123, %p124
      %p127 = scmp.ne.s32.totalorder %s112, %s126
      %p128 = scmp.eq.s32.totalorder %s27, 0
      %p129 = por %p127, %p128
      %s130 = ssub.s32 %s28, %s40
      %s131 = ssub.s32 %s29, %s36
      %s132 = sor.u32 %s130, %s131
      %p133 = scmp.eq.s32.totalorder %s132, 0
      %s135 = sadd.s32 %s134, 1
      %s136 = scalar_select %p133, %s134, %s135
      %p139 = pneg %p133
      %p140 = scmp.eq.s32.totalorder %s21, 1
      %p141 = por %p139, %p140
      %p142 = scmp.ne.s32.totalorder %s134, %s137
      %p143 = scmp.eq.s32.totalorder %s21, 0
      %p144 = por %p142, %p143
      %p145 = scmp.ne.s32.totalorder %s134, %s137
      %p146 = scmp.eq.s32.totalorder %s26, 1
      %p147 = por %p145, %p146
      %p148 = scmp.ne.s32.totalorder %s137, %s138
      %p149 = scmp.eq.s32.totalorder %s26, 0
      %p150 = por %p148, %p149
      %p151 = scmp.ne.s32.totalorder %s137, %s138
      %p152 = scmp.eq.s32.totalorder %s27, 1
      %p153 = por %p151, %p152
      %p155 = scmp.ne.s32.totalorder %s138, %s154
      %p156 = scmp.eq.s32.totalorder %s27, 0
      %p157 = por %p155, %p156
      %p158 = scmp.le.s32.totalorder 1, %s21
      %p159 = scmp.lt.s32.totalorder %s21, 3
      %p160 = pnand %p158, %p159
      %p161 = pneg %p160
      // Predicated region
      $region9: #{tpu_custom_call.1} parent=5 // pred_check
        _
      $region10: #{tpu_custom_call.1} parent=5 // pred_check_branch
        %163 = sbr.rel (%p160) target = $region12
      $region11: #{tpu_custom_call.1} parent=5 // pred_region
        %s164 = ssub.s32 %s21, 1
        // Predicated region
        $region13: #{tpu_custom_call.1} parent=11 // pred_check
          %p165 = pneg %p59
        $region14: #{tpu_custom_call.1} parent=11 // pred_check_branch
          %167 = sbr.rel (%p165) target = $region16
        $region15: #{tpu_custom_call.1} parent=11 // pred_region
          %p168 = scmp.lt.s32.totalorder %s31, 0
          %s169 = scalar_select %p168, %s31, 0
          %s170 = smul.addr %s169, 8
          %s171 = scalar_lea.vmem %s2, %s170
        $region16: #{tpu_custom_call.1} parent=11 // pred_fallthru
          _
        // Predicated region
        $region17: #{tpu_custom_call.1} parent=11 // pred_check
          %p172 = pneg %p80
        $region18: #{tpu_custom_call.1} parent=11 // pred_check_branch
          %174 = sbr.rel (%p172) target = $region20
        $region19: #{tpu_custom_call.1} parent=11 // pred_region
          _
        $region20: #{tpu_custom_call.1} parent=11 // pred_fallthru
          _
        // Predicated region
        $region21: #{tpu_custom_call.1} parent=11 // pred_check
          %p175 = pneg %p101
        $region22: #{tpu_custom_call.1} parent=11 // pred_check_branch
          %177 = sbr.rel (%p175) target = $region24
        $region23: #{tpu_custom_call.1} parent=11 // pred_region
          _
        $region24: #{tpu_custom_call.1} parent=11 // pred_fallthru
          _
        // Predicated region
        $region25: #{tpu_custom_call.1} parent=11 // pred_check
          %p178 = pneg %p122
        $region26: #{tpu_custom_call.1} parent=11 // pred_check_branch
          %180 = sbr.rel (%p178) target = $region28
        $region27: #{tpu_custom_call.1} parent=11 // pred_region
          _
        $region28: #{tpu_custom_call.1} parent=11 // pred_fallthru
          _
      $region12: #{tpu_custom_call.1} parent=5 // pred_fallthru
        _
      %p181 = scmp.lt.s32.totalorder %s21, 2
      // Predicated region
      $region29: #{tpu_custom_call.1} parent=5 // pred_check
        %p182 = pneg %p181
      $region30: #{tpu_custom_call.1} parent=5 // pred_check_branch
        %184 = sbr.rel (%p182) target = $region32
      $region31: #{tpu_custom_call.1} parent=5 // pred_region
        _
      $region32: #{tpu_custom_call.1} parent=5 // pred_fallthru
        _
      %p185 = scmp.le.s32.totalorder 1, %s21
      %p186 = scmp.lt.s32.totalorder %s21, 3
      %p187 = pnand %p185, %p186
      %p188 = pneg %p187
      // Predicated region
      $region33: #{tpu_custom_call.1} parent=5 // pred_check
        _
      $region34: #{tpu_custom_call.1} parent=5 // pred_check_branch
        %190 = sbr.rel (%p187) target = $region36
      $region35: #{tpu_custom_call.1} parent=5 // pred_region
        %s191 = ssub.s32 %s21, 1
        %p192 = scmp.lt.s32.totalorder %s31, 0
        %s193 = scalar_select %p192, %s31, 0
        %s194 = smul.addr %s193, 8
        %s195 = scalar_lea.vmem %s2, %s194
        %p196 = pneg %p59
        %p197 = pneg %p56
        %p198 = pneg %p80
        %p199 = pneg %p77
        %p200 = pneg %p101
        %p201 = pneg %p98
        %p202 = pneg %p122
        %p203 = pneg %p119
        %p204 = pneg %p150
        %p205 = pneg %p147
        %s206 = sand.u32 %s137, 1
        %s207 = scalar_lea.sflag [#allocation7], %s206
        %s208 = sand.u32 %s137, 1
        %s209 = smul.addr %s208, 8
        %s210 = scalar_lea.vmem [#allocation6], %s209
        %p211 = scmp.lt.s32.totalorder %s31, 0
        %s212 = scalar_select %p211, %s31, 0
        %s213 = smul.addr %s212, 8
        %s214 = scalar_lea.vmem %s2, %s213
        %s215 = smul.u32 %s31, 8
        %s216 = sshra.s32 %s215, 7
        %s217 = sand.u32 %s215, 127
        %s218 = sadd.s32 %s216, %s30
        %s219 = smul.u32 %s218, 128
        %s220 = sshra.s32 %s215, 7
        %s221 = sand.u32 %s215, 127
        %s222 = sadd.s32 %s219, %s221
        %s223 = sld [smem:[#allocation5 + %s222]]
        %s224 = scalar_lea.vmem %s1, %s223
        %p226 = scmp.lt.u32.totalorder 1, 8
        %p227 = pneg %p226
        // Predicated region
        $region37: #{tpu_custom_call.1} parent=35 // pred_check
          _
        $region38: #{tpu_custom_call.1} parent=35 // pred_check_branch
          %229 = sbr.rel (%p226) target = $region40
        $region39: #{tpu_custom_call.1} parent=35 // pred_region
          %s244 = sand.u32 1, 7
          %p245 = scmp.eq.s32.totalorder %s244, 0
          %p246 = pneg %p245
          // Predicated region
          $region52: #{tpu_custom_call.1} parent=39 // pred_check
            _
          $region53: #{tpu_custom_call.1} parent=39 // pred_check_branch
            %248 = sbr.rel (%p245) target = $region55
          $region54: #{tpu_custom_call.1} parent=39 // pred_region
            %s249 = sand.u32 1, 7
            %s250 = ssub.s32 1, %s249
            %s251 = scalar_lea.vmem %s224, %s250
            %s252 = ssub.s32 1, %s249
            %s253 = scalar_lea.vmem [#allocation2], %s252
            %s254 = sshllo.u32 0, %s249
            loop: start=0, step=1, limit=1
            $region56: #{tpu_custom_call.1} parent=54 // loop_pre_header
              _
            $region57: #{tpu_custom_call.1} parent=54 // loop_header
              %s256 = sphi 0, %s260
              %p257 = scmp.ge.s32.totalorder %s256, 1
              %s261 = sphi %s251, %s251
              %s262 = sphi %s253, %s253
            $region58: #{tpu_custom_call.1} parent=54 // loop_header_branch
              %259 = sbr.rel (%p257) target = $region62
            $region59: #{tpu_custom_call.1} parent=54 // loop_body
              %v263 = vld [vmem:[%s261] sm:%s254]
              %264 = vst [vmem:[%s262] sm:%s254] %v263
            $region60: #{tpu_custom_call.1} parent=54 // loop_footer
              %s260 = sadd.s32 1, %s256
            $region61: #{tpu_custom_call.1} parent=54 // loop_footer_branch
              %255 = sbr.rel target = $region57
            $region62: #{tpu_custom_call.1} parent=54 // loop_exit
              _
          $region55: #{tpu_custom_call.1} parent=39 // pred_fallthru
            _
        $region40: #{tpu_custom_call.1} parent=35 // pred_fallthru
          _
        // Predicated region
        $region41: #{tpu_custom_call.1} parent=35 // pred_check
          %p230 = pneg %p226
        $region42: #{tpu_custom_call.1} parent=35 // pred_check_branch
          %232 = sbr.rel (%p230) target = $region44
        $region43: #{tpu_custom_call.1} parent=35 // pred_region
          %s233 = sshllo.u32 0, 1
          loop: start=0, step=1, limit=1
          $region45: #{tpu_custom_call.1} parent=43 // loop_pre_header
            _
          $region46: #{tpu_custom_call.1} parent=43 // loop_header
            %s235 = sphi 0, %s239
            %p236 = scmp.ge.s32.totalorder %s235, 1
            %s240 = sphi %s224, %s224
            %s241 = sphi [#allocation2], [#allocation2]
          $region47: #{tpu_custom_call.1} parent=43 // loop_header_branch
            %238 = sbr.rel (%p236) target = $region51
          $region48: #{tpu_custom_call.1} parent=43 // loop_body
            %v242 = vld [vmem:[%s240] sm:%s233]
            %243 = vst [vmem:[%s241] sm:%s233] %v242
          $region49: #{tpu_custom_call.1} parent=43 // loop_footer
            %s239 = sadd.s32 1, %s235
          $region50: #{tpu_custom_call.1} parent=43 // loop_footer_branch
            %234 = sbr.rel target = $region46
          $region51: #{tpu_custom_call.1} parent=43 // loop_exit
            _
        $region44: #{tpu_custom_call.1} parent=35 // pred_fallthru
          _
        // Predicated region
        $region63: #{tpu_custom_call.1} parent=35 // pred_check
          _
        $region64: #{tpu_custom_call.1} parent=35 // pred_check_branch
          %267 = sbr.rel (0) target = $region66
        $region65: #{tpu_custom_call.1} parent=35 // pred_region
          %268 = vsyncadd [#allocation3], 16
        $region66: #{tpu_custom_call.1} parent=35 // pred_fallthru
          _
        %s269 = sadd.s32 %s215, 1
        %s270 = sshra.s32 %s269, 7
        %s271 = sand.u32 %s269, 127
        %s272 = sadd.s32 %s270, %s30
        %s273 = smul.u32 %s272, 128
        %s274 = sshra.s32 %s269, 7
        %s275 = sand.u32 %s269, 127
        %s276 = sadd.s32 %s273, %s275
        %s277 = sld [smem:[#allocation5 + %s276]]
        %s278 = scalar_lea.vmem %s1, %s277
        %s279 = scalar_lea.vmem [#allocation2], 1
        %s280 = scalar_lea.sflag [#allocation3], 1
        %p282 = scmp.lt.u32.totalorder 1, 8
        %p283 = pneg %p282
        // Predicated region
        $region67: #{tpu_custom_call.1} parent=35 // pred_check
          _
        $region68: #{tpu_custom_call.1} parent=35 // pred_check_branch
          %285 = sbr.rel (%p282) target = $region70
        $region69: #{tpu_custom_call.1} parent=35 // pred_region
          %s300 = sand.u32 1, 7
          %p301 = scmp.eq.s32.totalorder %s300, 0
          %p302 = pneg %p301
          // Predicated region
          $region82: #{tpu_custom_call.1} parent=69 // pred_check
            _
          $region83: #{tpu_custom_call.1} parent=69 // pred_check_branch
            %304 = sbr.rel (%p301) target = $region85
          $region84: #{tpu_custom_call.1} parent=69 // pred_region
            %s305 = sand.u32 1, 7
            %s306 = ssub.s32 1, %s305
            %s307 = scalar_lea.vmem %s278, %s306
            %s308 = ssub.s32 1, %s305
            %s309 = scalar_lea.vmem %s279, %s308 [#allocation2]
            %s310 = sshllo.u32 0, %s305
            loop: start=0, step=1, limit=1
            $region86: #{tpu_custom_call.1} parent=84 // loop_pre_header
              _
            $region87: #{tpu_custom_call.1} parent=84 // loop_header
              %s312 = sphi 0, %s316
              %p313 = scmp.ge.s32.totalorder %s312, 1
              %s317 = sphi %s307, %s307
              %s318 = sphi %s309, %s309
            $region88: #{tpu_custom_call.1} parent=84 // loop_header_branch
              %315 = sbr.rel (%p313) target = $region92
            $region89: #{tpu_custom_call.1} parent=84 // loop_body
              %v319 = vld [vmem:[%s317] sm:%s310]
              %320 = vst [vmem:[%s318] sm:%s310] %v319
            $region90: #{tpu_custom_call.1} parent=84 // loop_footer
              %s316 = sadd.s32 1, %s312
            $region91: #{tpu_custom_call.1} parent=84 // loop_footer_branch
              %311 = sbr.rel target = $region87
            $region92: #{tpu_custom_call.1} parent=84 // loop_exit
              _
          $region85: #{tpu_custom_call.1} parent=69 // pred_fallthru
            _
        $region70: #{tpu_custom_call.1} parent=35 // pred_fallthru
          _
        // Predicated region
        $region71: #{tpu_custom_call.1} parent=35 // pred_check
          %p286 = pneg %p282
        $region72: #{tpu_custom_call.1} parent=35 // pred_check_branch
          %288 = sbr.rel (%p286) target = $region74
        $region73: #{tpu_custom_call.1} parent=35 // pred_region
          %s289 = sshllo.u32 0, 1
          loop: start=0, step=1, limit=1
          $region75: #{tpu_custom_call.1} parent=73 // loop_pre_header
            _
          $region76: #{tpu_custom_call.1} parent=73 // loop_header
            %s291 = sphi 0, %s295
            %p292 = scmp.ge.s32.totalorder %s291, 1
            %s296 = sphi %s278, %s278
            %s297 = sphi %s279, %s279
          $region77: #{tpu_custom_call.1} parent=73 // loop_header_branch
            %294 = sbr.rel (%p292) target = $region81
          $region78: #{tpu_custom_call.1} parent=73 // loop_body
            %v298 = vld [vmem:[%s296] sm:%s289]
            %299 = vst [vmem:[%s297] sm:%s289] %v298
          $region79: #{tpu_custom_call.1} parent=73 // loop_footer
            %s295 = sadd.s32 1, %s291
          $region80: #{tpu_custom_call.1} parent=73 // loop_footer_branch
            %290 = sbr.rel target = $region76
          $region81: #{tpu_custom_call.1} parent=73 // loop_exit
            _
        $region74: #{tpu_custom_call.1} parent=35 // pred_fallthru
          _
        // Predicated region
        $region93: #{tpu_custom_call.1} parent=35 // pred_check
          _
        $region94: #{tpu_custom_call.1} parent=35 // pred_check_branch
          %323 = sbr.rel (0) target = $region96
        $region95: #{tpu_custom_call.1} parent=35 // pred_region
          %324 = vsyncadd %s280, 16
        $region96: #{tpu_custom_call.1} parent=35 // pred_fallthru
          _
        %s325 = sadd.s32 %s215, 2
        %s326 = sshra.s32 %s325, 7
        %s327 = sand.u32 %s325, 127
        %s328 = sadd.s32 %s326, %s30
        %s329 = smul.u32 %s328, 128
        %s330 = sshra.s32 %s325, 7
        %s331 = sand.u32 %s325, 127
        %s332 = sadd.s32 %s329, %s331
        %s333 = sld [smem:[#allocation5 + %s332]]
        %s334 = scalar_lea.vmem %s1, %s333
        %s335 = scalar_lea.vmem [#allocation2], 2
        %s336 = scalar_lea.sflag [#allocation3], 2
        %p338 = scmp.lt.u32.totalorder 1, 8
        %p339 = pneg %p338
        // Predicated region
        $region97: #{tpu_custom_call.1} parent=35 // pred_check
          _
        $region98: #{tpu_custom_call.1} parent=35 // pred_check_branch
          %341 = sbr.rel (%p338) target = $region100
        $region99: #{tpu_custom_call.1} parent=35 // pred_region
          %s356 = sand.u32 1, 7
          %p357 = scmp.eq.s32.totalorder %s356, 0
          %p358 = pneg %p357
          // Predicated region
          $region112: #{tpu_custom_call.1} parent=99 // pred_check
            _
          $region113: #{tpu_custom_call.1} parent=99 // pred_check_branch
            %360 = sbr.rel (%p357) target = $region115
          $region114: #{tpu_custom_call.1} parent=99 // pred_region
            %s361 = sand.u32 1, 7
            %s362 = ssub.s32 1, %s361
            %s363 = scalar_lea.vmem %s334, %s362
            %s364 = ssub.s32 1, %s361
            %s365 = scalar_lea.vmem %s335, %s364 [#allocation2]
            %s366 = sshllo.u32 0, %s361
            loop: start=0, step=1, limit=1
            $region116: #{tpu_custom_call.1} parent=114 // loop_pre_header
              _
            $region117: #{tpu_custom_call.1} parent=114 // loop_header
              %s368 = sphi 0, %s372
              %p369 = scmp.ge.s32.totalorder %s368, 1
              %s373 = sphi %s363, %s363
              %s374 = sphi %s365, %s365
            $region118: #{tpu_custom_call.1} parent=114 // loop_header_branch
              %371 = sbr.rel (%p369) target = $region122
            $region119: #{tpu_custom_call.1} parent=114 // loop_body
              %v375 = vld [vmem:[%s373] sm:%s366]
              %376 = vst [vmem:[%s374] sm:%s366] %v375
            $region120: #{tpu_custom_call.1} parent=114 // loop_footer
              %s372 = sadd.s32 1, %s368
            $region121: #{tpu_custom_call.1} parent=114 // loop_footer_branch
              %367 = sbr.rel target = $region117
            $region122: #{tpu_custom_call.1} parent=114 // loop_exit
              _
          $region115: #{tpu_custom_call.1} parent=99 // pred_fallthru
            _
        $region100: #{tpu_custom_call.1} parent=35 // pred_fallthru
          _
        // Predicated region
        $region101: #{tpu_custom_call.1} parent=35 // pred_check
          %p342 = pneg %p338
        $region102: #{tpu_custom_call.1} parent=35 // pred_check_branch
          %344 = sbr.rel (%p342) target = $region104
        $region103: #{tpu_custom_call.1} parent=35 // pred_region
          %s345 = sshllo.u32 0, 1
          loop: start=0, step=1, limit=1
          $region105: #{tpu_custom_call.1} parent=103 // loop_pre_header
            _
          $region106: #{tpu_custom_call.1} parent=103 // loop_header
            %s347 = sphi 0, %s351
            %p348 = scmp.ge.s32.totalorder %s347, 1
            %s352 = sphi %s334, %s334
            %s353 = sphi %s335, %s335
          $region107: #{tpu_custom_call.1} parent=103 // loop_header_branch
            %350 = sbr.rel (%p348) target = $region111
          $region108: #{tpu_custom_call.1} parent=103 // loop_body
            %v354 = vld [vmem:[%s352] sm:%s345]
            %355 = vst [vmem:[%s353] sm:%s345] %v354
          $region109: #{tpu_custom_call.1} parent=103 // loop_footer
            %s351 = sadd.s32 1, %s347
          $region110: #{tpu_custom_call.1} parent=103 // loop_footer_branch
            %346 = sbr.rel target = $region106
          $region111: #{tpu_custom_call.1} parent=103 // loop_exit
            _
        $region104: #{tpu_custom_call.1} parent=35 // pred_fallthru
          _
        // Predicated region
        $region123: #{tpu_custom_call.1} parent=35 // pred_check
          _
        $region124: #{tpu_custom_call.1} parent=35 // pred_check_branch
          %379 = sbr.rel (0) target = $region126
        $region125: #{tpu_custom_call.1} parent=35 // pred_region
          %380 = vsyncadd %s336, 16
        $region126: #{tpu_custom_call.1} parent=35 // pred_fallthru
          _
        %s381 = sadd.s32 %s215, 3
        %s382 = sshra.s32 %s381, 7
        %s383 = sand.u32 %s381, 127
        %s384 = sadd.s32 %s382, %s30
        %s385 = smul.u32 %s384, 128
        %s386 = sshra.s32 %s381, 7
        %s387 = sand.u32 %s381, 127
        %s388 = sadd.s32 %s385, %s387
        %s389 = sld [smem:[#allocation5 + %s388]]
        %s390 = scalar_lea.vmem %s1, %s389
        %s391 = scalar_lea.vmem [#allocation2], 3
        %s392 = scalar_lea.sflag [#allocation3], 3
        %p394 = scmp.lt.u32.totalorder 1, 8
        %p395 = pneg %p394
        // Predicated region
        $region127: #{tpu_custom_call.1} parent=35 // pred_check
          _
        $region128: #{tpu_custom_call.1} parent=35 // pred_check_branch
          %397 = sbr.rel (%p394) target = $region130
        $region129: #{tpu_custom_call.1} parent=35 // pred_region
          %s412 = sand.u32 1, 7
          %p413 = scmp.eq.s32.totalorder %s412, 0
          %p414 = pneg %p413
          // Predicated region
          $region142: #{tpu_custom_call.1} parent=129 // pred_check
            _
          $region143: #{tpu_custom_call.1} parent=129 // pred_check_branch
            %416 = sbr.rel (%p413) target = $region145
          $region144: #{tpu_custom_call.1} parent=129 // pred_region
            %s417 = sand.u32 1, 7
            %s418 = ssub.s32 1, %s417
            %s419 = scalar_lea.vmem %s390, %s418
            %s420 = ssub.s32 1, %s417
            %s421 = scalar_lea.vmem %s391, %s420 [#allocation2]
            %s422 = sshllo.u32 0, %s417
            loop: start=0, step=1, limit=1
            $region146: #{tpu_custom_call.1} parent=144 // loop_pre_header
              _
            $region147: #{tpu_custom_call.1} parent=144 // loop_header
              %s424 = sphi 0, %s428
              %p425 = scmp.ge.s32.totalorder %s424, 1
              %s429 = sphi %s419, %s419
              %s430 = sphi %s421, %s421
            $region148: #{tpu_custom_call.1} parent=144 // loop_header_branch
              %427 = sbr.rel (%p425) target = $region152
            $region149: #{tpu_custom_call.1} parent=144 // loop_body
              %v431 = vld [vmem:[%s429] sm:%s422]
              %432 = vst [vmem:[%s430] sm:%s422] %v431
            $region150: #{tpu_custom_call.1} parent=144 // loop_footer
              %s428 = sadd.s32 1, %s424
            $region151: #{tpu_custom_call.1} parent=144 // loop_footer_branch
              %423 = sbr.rel target = $region147
            $region152: #{tpu_custom_call.1} parent=144 // loop_exit
              _
          $region145: #{tpu_custom_call.1} parent=129 // pred_fallthru
            _
        $region130: #{tpu_custom_call.1} parent=35 // pred_fallthru
          _
        // Predicated region
        $region131: #{tpu_custom_call.1} parent=35 // pred_check
          %p398 = pneg %p394
        $region132: #{tpu_custom_call.1} parent=35 // pred_check_branch
          %400 = sbr.rel (%p398) target = $region134
        $region133: #{tpu_custom_call.1} parent=35 // pred_region
          %s401 = sshllo.u32 0, 1
          loop: start=0, step=1, limit=1
          $region135: #{tpu_custom_call.1} parent=133 // loop_pre_header
            _
          $region136: #{tpu_custom_call.1} parent=133 // loop_header
            %s403 = sphi 0, %s407
            %p404 = scmp.ge.s32.totalorder %s403, 1
            %s408 = sphi %s390, %s390
            %s409 = sphi %s391, %s391
          $region137: #{tpu_custom_call.1} parent=133 // loop_header_branch
            %406 = sbr.rel (%p404) target = $region141
          $region138: #{tpu_custom_call.1} parent=133 // loop_body
            %v410 = vld [vmem:[%s408] sm:%s401]
            %411 = vst [vmem:[%s409] sm:%s401] %v410
          $region139: #{tpu_custom_call.1} parent=133 // loop_footer
            %s407 = sadd.s32 1, %s403
          $region140: #{tpu_custom_call.1} parent=133 // loop_footer_branch
            %402 = sbr.rel target = $region136
          $region141: #{tpu_custom_call.1} parent=133 // loop_exit
            _
        $region134: #{tpu_custom_call.1} parent=35 // pred_fallthru
          _
        // Predicated region
        $region153: #{tpu_custom_call.1} parent=35 // pred_check
          _
        $region154: #{tpu_custom_call.1} parent=35 // pred_check_branch
          %435 = sbr.rel (0) target = $region156
        $region155: #{tpu_custom_call.1} parent=35 // pred_region
          %436 = vsyncadd %s392, 16
        $region156: #{tpu_custom_call.1} parent=35 // pred_fallthru
          _
        %s437 = sadd.s32 %s215, 4
        %s438 = sshra.s32 %s437, 7
        %s439 = sand.u32 %s437, 127
        %s440 = sadd.s32 %s438, %s30
        %s441 = smul.u32 %s440, 128
        %s442 = sshra.s32 %s437, 7
        %s443 = sand.u32 %s437, 127
        %s444 = sadd.s32 %s441, %s443
        %s445 = sld [smem:[#allocation5 + %s444]]
        %s446 = scalar_lea.vmem %s1, %s445
        %s447 = scalar_lea.vmem [#allocation2], 4
        %s448 = scalar_lea.sflag [#allocation3], 4
        %p450 = scmp.lt.u32.totalorder 1, 8
        %p451 = pneg %p450
        // Predicated region
        $region157: #{tpu_custom_call.1} parent=35 // pred_check
          _
        $region158: #{tpu_custom_call.1} parent=35 // pred_check_branch
          %453 = sbr.rel (%p450) target = $region160
        $region159: #{tpu_custom_call.1} parent=35 // pred_region
          %s468 = sand.u32 1, 7
          %p469 = scmp.eq.s32.totalorder %s468, 0
          %p470 = pneg %p469
          // Predicated region
          $region172: #{tpu_custom_call.1} parent=159 // pred_check
            _
          $region173: #{tpu_custom_call.1} parent=159 // pred_check_branch
            %472 = sbr.rel (%p469) target = $region175
          $region174: #{tpu_custom_call.1} parent=159 // pred_region
            %s473 = sand.u32 1, 7
            %s474 = ssub.s32 1, %s473
            %s475 = scalar_lea.vmem %s446, %s474
            %s476 = ssub.s32 1, %s473
            %s477 = scalar_lea.vmem %s447, %s476 [#allocation2]
            %s478 = sshllo.u32 0, %s473
            loop: start=0, step=1, limit=1
            $region176: #{tpu_custom_call.1} parent=174 // loop_pre_header
              _
            $region177: #{tpu_custom_call.1} parent=174 // loop_header
              %s480 = sphi 0, %s484
              %p481 = scmp.ge.s32.totalorder %s480, 1
              %s485 = sphi %s475, %s475
              %s486 = sphi %s477, %s477
            $region178: #{tpu_custom_call.1} parent=174 // loop_header_branch
              %483 = sbr.rel (%p481) target = $region182
            $region179: #{tpu_custom_call.1} parent=174 // loop_body
              %v487 = vld [vmem:[%s485] sm:%s478]
              %488 = vst [vmem:[%s486] sm:%s478] %v487
            $region180: #{tpu_custom_call.1} parent=174 // loop_footer
              %s484 = sadd.s32 1, %s480
            $region181: #{tpu_custom_call.1} parent=174 // loop_footer_branch
              %479 = sbr.rel target = $region177
            $region182: #{tpu_custom_call.1} parent=174 // loop_exit
              _
          $region175: #{tpu_custom_call.1} parent=159 // pred_fallthru
            _
        $region160: #{tpu_custom_call.1} parent=35 // pred_fallthru
          _
        // Predicated region
        $region161: #{tpu_custom_call.1} parent=35 // pred_check
          %p454 = pneg %p450
        $region162: #{tpu_custom_call.1} parent=35 // pred_check_branch
          %456 = sbr.rel (%p454) target = $region164
        $region163: #{tpu_custom_call.1} parent=35 // pred_region
          %s457 = sshllo.u32 0, 1
          loop: start=0, step=1, limit=1
          $region165: #{tpu_custom_call.1} parent=163 // loop_pre_header
            _
          $region166: #{tpu_custom_call.1} parent=163 // loop_header
            %s459 = sphi 0, %s463
            %p460 = scmp.ge.s32.totalorder %s459, 1
            %s464 = sphi %s446, %s446
            %s465 = sphi %s447, %s447
          $region167: #{tpu_custom_call.1} parent=163 // loop_header_branch
            %462 = sbr.rel (%p460) target = $region171
          $region168: #{tpu_custom_call.1} parent=163 // loop_body
            %v466 = vld [vmem:[%s464] sm:%s457]
            %467 = vst [vmem:[%s465] sm:%s457] %v466
          $region169: #{tpu_custom_call.1} parent=163 // loop_footer
            %s463 = sadd.s32 1, %s459
          $region170: #{tpu_custom_call.1} parent=163 // loop_footer_branch
            %458 = sbr.rel target = $region166
          $region171: #{tpu_custom_call.1} parent=163 // loop_exit
            _
        $region164: #{tpu_custom_call.1} parent=35 // pred_fallthru
          _
        // Predicated region
        $region183: #{tpu_custom_call.1} parent=35 // pred_check
          _
        $region184: #{tpu_custom_call.1} parent=35 // pred_check_branch
          %491 = sbr.rel (0) target = $region186
        $region185: #{tpu_custom_call.1} parent=35 // pred_region
          %492 = vsyncadd %s448, 16
        $region186: #{tpu_custom_call.1} parent=35 // pred_fallthru
          _
        %s493 = sadd.s32 %s215, 5
        %s494 = sshra.s32 %s493, 7
        %s495 = sand.u32 %s493, 127
        %s496 = sadd.s32 %s494, %s30
        %s497 = smul.u32 %s496, 128
        %s498 = sshra.s32 %s493, 7
        %s499 = sand.u32 %s493, 127
        %s500 = sadd.s32 %s497, %s499
        %s501 = sld [smem:[#allocation5 + %s500]]
        %s502 = scalar_lea.vmem %s1, %s501
        %s503 = scalar_lea.vmem [#allocation2], 5
        %s504 = scalar_lea.sflag [#allocation3], 5
        %p506 = scmp.lt.u32.totalorder 1, 8
        %p507 = pneg %p506
        // Predicated region
        $region187: #{tpu_custom_call.1} parent=35 // pred_check
          _
        $region188: #{tpu_custom_call.1} parent=35 // pred_check_branch
          %509 = sbr.rel (%p506) target = $region190
        $region189: #{tpu_custom_call.1} parent=35 // pred_region
          %s524 = sand.u32 1, 7
          %p525 = scmp.eq.s32.totalorder %s524, 0
          %p526 = pneg %p525
          // Predicated region
          $region202: #{tpu_custom_call.1} parent=189 // pred_check
            _
          $region203: #{tpu_custom_call.1} parent=189 // pred_check_branch
            %528 = sbr.rel (%p525) target = $region205
          $region204: #{tpu_custom_call.1} parent=189 // pred_region
            %s529 = sand.u32 1, 7
            %s530 = ssub.s32 1, %s529
            %s531 = scalar_lea.vmem %s502, %s530
            %s532 = ssub.s32 1, %s529
            %s533 = scalar_lea.vmem %s503, %s532 [#allocation2]
            %s534 = sshllo.u32 0, %s529
            loop: start=0, step=1, limit=1
            $region206: #{tpu_custom_call.1} parent=204 // loop_pre_header
              _
            $region207: #{tpu_custom_call.1} parent=204 // loop_header
              %s536 = sphi 0, %s540
              %p537 = scmp.ge.s32.totalorder %s536, 1
              %s541 = sphi %s531, %s531
              %s542 = sphi %s533, %s533
            $region208: #{tpu_custom_call.1} parent=204 // loop_header_branch
              %539 = sbr.rel (%p537) target = $region212
            $region209: #{tpu_custom_call.1} parent=204 // loop_body
              %v543 = vld [vmem:[%s541] sm:%s534]
              %544 = vst [vmem:[%s542] sm:%s534] %v543
            $region210: #{tpu_custom_call.1} parent=204 // loop_footer
              %s540 = sadd.s32 1, %s536
            $region211: #{tpu_custom_call.1} parent=204 // loop_footer_branch
              %535 = sbr.rel target = $region207
            $region212: #{tpu_custom_call.1} parent=204 // loop_exit
              _
          $region205: #{tpu_custom_call.1} parent=189 // pred_fallthru
            _
        $region190: #{tpu_custom_call.1} parent=35 // pred_fallthru
          _
        // Predicated region
        $region191: #{tpu_custom_call.1} parent=35 // pred_check
          %p510 = pneg %p506
        $region192: #{tpu_custom_call.1} parent=35 // pred_check_branch
          %512 = sbr.rel (%p510) target = $region194
        $region193: #{tpu_custom_call.1} parent=35 // pred_region
          %s513 = sshllo.u32 0, 1
          loop: start=0, step=1, limit=1
          $region195: #{tpu_custom_call.1} parent=193 // loop_pre_header
            _
          $region196: #{tpu_custom_call.1} parent=193 // loop_header
            %s515 = sphi 0, %s519
            %p516 = scmp.ge.s32.totalorder %s515, 1
            %s520 = sphi %s502, %s502
            %s521 = sphi %s503, %s503
          $region197: #{tpu_custom_call.1} parent=193 // loop_header_branch
            %518 = sbr.rel (%p516) target = $region201
          $region198: #{tpu_custom_call.1} parent=193 // loop_body
            %v522 = vld [vmem:[%s520] sm:%s513]
            %523 = vst [vmem:[%s521] sm:%s513] %v522
          $region199: #{tpu_custom_call.1} parent=193 // loop_footer
            %s519 = sadd.s32 1, %s515
          $region200: #{tpu_custom_call.1} parent=193 // loop_footer_branch
            %514 = sbr.rel target = $region196
          $region201: #{tpu_custom_call.1} parent=193 // loop_exit
            _
        $region194: #{tpu_custom_call.1} parent=35 // pred_fallthru
          _
        // Predicated region
        $region213: #{tpu_custom_call.1} parent=35 // pred_check
          _
        $region214: #{tpu_custom_call.1} parent=35 // pred_check_branch
          %547 = sbr.rel (0) target = $region216
        $region215: #{tpu_custom_call.1} parent=35 // pred_region
          %548 = vsyncadd %s504, 16
        $region216: #{tpu_custom_call.1} parent=35 // pred_fallthru
          _
        %s549 = sadd.s32 %s215, 6
        %s550 = sshra.s32 %s549, 7
        %s551 = sand.u32 %s549, 127
        %s552 = sadd.s32 %s550, %s30
        %s553 = smul.u32 %s552, 128
        %s554 = sshra.s32 %s549, 7
        %s555 = sand.u32 %s549, 127
        %s556 = sadd.s32 %s553, %s555
        %s557 = sld [smem:[#allocation5 + %s556]]
        %s558 = scalar_lea.vmem %s1, %s557
        %s559 = scalar_lea.vmem [#allocation2], 6
        %s560 = scalar_lea.sflag [#allocation3], 6
        %p562 = scmp.lt.u32.totalorder 1, 8
        %p563 = pneg %p562
        // Predicated region
        $region217: #{tpu_custom_call.1} parent=35 // pred_check
          _
        $region218: #{tpu_custom_call.1} parent=35 // pred_check_branch
          %565 = sbr.rel (%p562) target = $region220
        $region219: #{tpu_custom_call.1} parent=35 // pred_region
          %s580 = sand.u32 1, 7
          %p581 = scmp.eq.s32.totalorder %s580, 0
          %p582 = pneg %p581
          // Predicated region
          $region232: #{tpu_custom_call.1} parent=219 // pred_check
            _
          $region233: #{tpu_custom_call.1} parent=219 // pred_check_branch
            %584 = sbr.rel (%p581) target = $region235
          $region234: #{tpu_custom_call.1} parent=219 // pred_region
            %s585 = sand.u32 1, 7
            %s586 = ssub.s32 1, %s585
            %s587 = scalar_lea.vmem %s558, %s586
            %s588 = ssub.s32 1, %s585
            %s589 = scalar_lea.vmem %s559, %s588 [#allocation2]
            %s590 = sshllo.u32 0, %s585
            loop: start=0, step=1, limit=1
            $region236: #{tpu_custom_call.1} parent=234 // loop_pre_header
              _
            $region237: #{tpu_custom_call.1} parent=234 // loop_header
              %s592 = sphi 0, %s596
              %p593 = scmp.ge.s32.totalorder %s592, 1
              %s597 = sphi %s587, %s587
              %s598 = sphi %s589, %s589
            $region238: #{tpu_custom_call.1} parent=234 // loop_header_branch
              %595 = sbr.rel (%p593) target = $region242
            $region239: #{tpu_custom_call.1} parent=234 // loop_body
              %v599 = vld [vmem:[%s597] sm:%s590]
              %600 = vst [vmem:[%s598] sm:%s590] %v599
            $region240: #{tpu_custom_call.1} parent=234 // loop_footer
              %s596 = sadd.s32 1, %s592
            $region241: #{tpu_custom_call.1} parent=234 // loop_footer_branch
              %591 = sbr.rel target = $region237
            $region242: #{tpu_custom_call.1} parent=234 // loop_exit
              _
          $region235: #{tpu_custom_call.1} parent=219 // pred_fallthru
            _
        $region220: #{tpu_custom_call.1} parent=35 // pred_fallthru
          _
        // Predicated region
        $region221: #{tpu_custom_call.1} parent=35 // pred_check
          %p566 = pneg %p562
        $region222: #{tpu_custom_call.1} parent=35 // pred_check_branch
          %568 = sbr.rel (%p566) target = $region224
        $region223: #{tpu_custom_call.1} parent=35 // pred_region
          %s569 = sshllo.u32 0, 1
          loop: start=0, step=1, limit=1
          $region225: #{tpu_custom_call.1} parent=223 // loop_pre_header
            _
          $region226: #{tpu_custom_call.1} parent=223 // loop_header
            %s571 = sphi 0, %s575
            %p572 = scmp.ge.s32.totalorder %s571, 1
            %s576 = sphi %s558, %s558
            %s577 = sphi %s559, %s559
          $region227: #{tpu_custom_call.1} parent=223 // loop_header_branch
            %574 = sbr.rel (%p572) target = $region231
          $region228: #{tpu_custom_call.1} parent=223 // loop_body
            %v578 = vld [vmem:[%s576] sm:%s569]
            %579 = vst [vmem:[%s577] sm:%s569] %v578
          $region229: #{tpu_custom_call.1} parent=223 // loop_footer
            %s575 = sadd.s32 1, %s571
          $region230: #{tpu_custom_call.1} parent=223 // loop_footer_branch
            %570 = sbr.rel target = $region226
          $region231: #{tpu_custom_call.1} parent=223 // loop_exit
            _
        $region224: #{tpu_custom_call.1} parent=35 // pred_fallthru
          _
        // Predicated region
        $region243: #{tpu_custom_call.1} parent=35 // pred_check
          _
        $region244: #{tpu_custom_call.1} parent=35 // pred_check_branch
          %603 = sbr.rel (0) target = $region246
        $region245: #{tpu_custom_call.1} parent=35 // pred_region
          %604 = vsyncadd %s560, 16
        $region246: #{tpu_custom_call.1} parent=35 // pred_fallthru
          _
        %s605 = sadd.s32 %s215, 7
        %s606 = sshra.s32 %s605, 7
        %s607 = sand.u32 %s605, 127
        %s608 = sadd.s32 %s606, %s30
        %s609 = smul.u32 %s608, 128
        %s610 = sshra.s32 %s605, 7
        %s611 = sand.u32 %s605, 127
        %s612 = sadd.s32 %s609, %s611
        %s613 = sld [smem:[#allocation5 + %s612]]
        %s614 = scalar_lea.vmem %s1, %s613
        %s615 = scalar_lea.vmem [#allocation2], 7
        %s616 = scalar_lea.sflag [#allocation3], 7
        %p618 = scmp.lt.u32.totalorder 1, 8
        %p619 = pneg %p618
        // Predicated region
        $region247: #{tpu_custom_call.1} parent=35 // pred_check
          _
        $region248: #{tpu_custom_call.1} parent=35 // pred_check_branch
          %621 = sbr.rel (%p618) target = $region250
        $region249: #{tpu_custom_call.1} parent=35 // pred_region
          %s636 = sand.u32 1, 7
          %p637 = scmp.eq.s32.totalorder %s636, 0
          %p638 = pneg %p637
          // Predicated region
          $region262: #{tpu_custom_call.1} parent=249 // pred_check
            _
          $region263: #{tpu_custom_call.1} parent=249 // pred_check_branch
            %640 = sbr.rel (%p637) target = $region265
          $region264: #{tpu_custom_call.1} parent=249 // pred_region
            %s641 = sand.u32 1, 7
            %s642 = ssub.s32 1, %s641
            %s643 = scalar_lea.vmem %s614, %s642
            %s644 = ssub.s32 1, %s641
            %s645 = scalar_lea.vmem %s615, %s644 [#allocation2]
            %s646 = sshllo.u32 0, %s641
            loop: start=0, step=1, limit=1
            $region266: #{tpu_custom_call.1} parent=264 // loop_pre_header
              _
            $region267: #{tpu_custom_call.1} parent=264 // loop_header
              %s648 = sphi 0, %s652
              %p649 = scmp.ge.s32.totalorder %s648, 1
              %s653 = sphi %s643, %s643
              %s654 = sphi %s645, %s645
            $region268: #{tpu_custom_call.1} parent=264 // loop_header_branch
              %651 = sbr.rel (%p649) target = $region272
            $region269: #{tpu_custom_call.1} parent=264 // loop_body
              %v655 = vld [vmem:[%s653] sm:%s646]
              %656 = vst [vmem:[%s654] sm:%s646] %v655
            $region270: #{tpu_custom_call.1} parent=264 // loop_footer
              %s652 = sadd.s32 1, %s648
            $region271: #{tpu_custom_call.1} parent=264 // loop_footer_branch
              %647 = sbr.rel target = $region267
            $region272: #{tpu_custom_call.1} parent=264 // loop_exit
              _
          $region265: #{tpu_custom_call.1} parent=249 // pred_fallthru
            _
        $region250: #{tpu_custom_call.1} parent=35 // pred_fallthru
          _
        // Predicated region
        $region251: #{tpu_custom_call.1} parent=35 // pred_check
          %p622 = pneg %p618
        $region252: #{tpu_custom_call.1} parent=35 // pred_check_branch
          %624 = sbr.rel (%p622) target = $region254
        $region253: #{tpu_custom_call.1} parent=35 // pred_region
          %s625 = sshllo.u32 0, 1
          loop: start=0, step=1, limit=1
          $region255: #{tpu_custom_call.1} parent=253 // loop_pre_header
            _
          $region256: #{tpu_custom_call.1} parent=253 // loop_header
            %s627 = sphi 0, %s631
            %p628 = scmp.ge.s32.totalorder %s627, 1
            %s632 = sphi %s614, %s614
            %s633 = sphi %s615, %s615
          $region257: #{tpu_custom_call.1} parent=253 // loop_header_branch
            %630 = sbr.rel (%p628) target = $region261
          $region258: #{tpu_custom_call.1} parent=253 // loop_body
            %v634 = vld [vmem:[%s632] sm:%s625]
            %635 = vst [vmem:[%s633] sm:%s625] %v634
          $region259: #{tpu_custom_call.1} parent=253 // loop_footer
            %s631 = sadd.s32 1, %s627
          $region260: #{tpu_custom_call.1} parent=253 // loop_footer_branch
            %626 = sbr.rel target = $region256
          $region261: #{tpu_custom_call.1} parent=253 // loop_exit
            _
        $region254: #{tpu_custom_call.1} parent=35 // pred_fallthru
          _
        // Predicated region
        $region273: #{tpu_custom_call.1} parent=35 // pred_check
          _
        $region274: #{tpu_custom_call.1} parent=35 // pred_check_branch
          %659 = sbr.rel (0) target = $region276
        $region275: #{tpu_custom_call.1} parent=35 // pred_region
          %660 = vsyncadd %s616, 16
        $region276: #{tpu_custom_call.1} parent=35 // pred_fallthru
          _
        %s661 = smul.u32 1, 1
        %s662 = sshll.u32 %s661, 4
        %663 = dma.done [#allocation3], %s662
        %s664 = sshll.u32 %s661, 4
        %665 = dma.done %s280, %s664
        %s666 = sshll.u32 %s661, 4
        %667 = dma.done %s336, %s666
        %s668 = sshll.u32 %s661, 4
        %669 = dma.done %s392, %s668
        %s670 = sshll.u32 %s661, 4
        %671 = dma.done %s448, %s670
        %s672 = sshll.u32 %s661, 4
        %673 = dma.done %s504, %s672
        %s674 = sshll.u32 %s661, 4
        %675 = dma.done %s560, %s674
        %s676 = sshll.u32 %s661, 4
        %677 = dma.done %s616, %s676
        %v678 = vld [vmem:[#allocation2] sm:$0xff]
        %v679 = vld [vmem:[%s214] sm:$0xff]
        %v680 = vadd.f32 %v678, %v679
        %v681 = vld [vmem:[%s3] sm:$0x1]
        %v683 = vlaneseq
        %v684 = vshrl.u32 %v683, 7
        %v685 = vsub.s32 0, %v684
        %v686 = vrot.slane %v681, %v685
        %v688 = vadd.f32 %v680, %v686
        %vm689 = vcmask 261120
        %v690 = vsel %vm689, %v688, 0.0
        %691 = vadd.xlane.f32.xlu0 %v690
        %v692 = vpop.xlane.xlu0 %691
        %v693 = vrcp.pop 32.0
        %v694 = vmul.f32 %v692, %v693
        %v695 = vsub.f32 %v688, %v694
        %v696 = vmul.f32 %v695, %v695
        %v697 = vsel %vm689, %v696, 0.0
        %698 = vadd.xlane.f32.xlu0 %v697
        %v699 = vpop.xlane.xlu0 %698
        %v700 = vmul.f32 %v699, %v693
        %v701 = vadd.f32 %v700, 1e-12
        %v702 = vrsqrt.pop %v701
        %v703 = vmul.f32 %v695, %v702
        %v704 = vld [vmem:[%s4] sm:$0x1]
        %v706 = vlaneseq
        %v707 = vshrl.u32 %v706, 7
        %v708 = vsub.s32 0, %v707
        %v709 = vrot.slane %v704, %v708
        %v711 = vmul.f32 %v703, %v709
        %v712 = vld [vmem:[%s5] sm:$0x1]
        %v714 = vlaneseq
        %v715 = vshrl.u32 %v714, 7
        %v716 = vsub.s32 0, %v715
        %v717 = vrot.slane %v712, %v716
        %v719 = vadd.f32 %v711, %v717
        %720 = vst.msk [vmem:[%s210] sm:$0xff] %vm689, %v719
        %s721 = sand.u32 %s137, 1
        %s722 = scalar_lea.sflag [#allocation7], %s721
        %s723 = sand.u32 %s137, 1
        %s724 = smul.addr %s723, 8
        %s725 = scalar_lea.vmem [#allocation6], %s724
        // Predicated region
        $region277: #{tpu_custom_call.1} parent=35 // pred_check
          %p726 = pneg %p147
        $region278: #{tpu_custom_call.1} parent=35 // pred_check_branch
          %728 = sbr.rel (%p726) target = $region280
        $region279: #{tpu_custom_call.1} parent=35 // pred_region
          %s730 = ssub.s32 128, 128
          %731 = vsyncadd %s722, %s730
          %s732 = sadd.s32 %s31, %s30
          %s733 = smul.addr %s732, 128
          %s734 = scalar_lea.hbm %s6, %s733
          %s736 = sshll.u32 %s725, 4
          %s737 = int_to_ptr.vmem [resolvable:$true] %s736
          %739 = dma.vmem_to_hbm [thread:$0]  %s737, 128, %s734, %s722
        $region280: #{tpu_custom_call.1} parent=35 // pred_fallthru
          _
      $region36: #{tpu_custom_call.1} parent=5 // pred_fallthru
        _
      %p740 = scmp.le.s32.totalorder 2, %s21
      // Predicated region
      $region281: #{tpu_custom_call.1} parent=5 // pred_check
        %p741 = pneg %p740
      $region282: #{tpu_custom_call.1} parent=5 // pred_check_branch
        %743 = sbr.rel (%p741) target = $region284
      $region283: #{tpu_custom_call.1} parent=5 // pred_region
        %s744 = ssub.s32 %s21, 2
        // Predicated region
        $region285: #{tpu_custom_call.1} parent=283 // pred_check
          %p745 = pneg %p153
        $region286: #{tpu_custom_call.1} parent=283 // pred_check_branch
          %747 = sbr.rel (%p745) target = $region288
        $region287: #{tpu_custom_call.1} parent=283 // pred_region
          %s748 = sand.u32 %s138, 1
          %s749 = scalar_lea.sflag [#allocation7], %s748
          %s750 = sand.u32 %s138, 1
          %s751 = smul.addr %s750, 8
          %s752 = scalar_lea.vmem [#allocation6], %s751
          %753 = dma.done %s749, 128
        $region288: #{tpu_custom_call.1} parent=283 // pred_fallthru
          _
      $region284: #{tpu_custom_call.1} parent=5 // pred_fallthru
        _
    $region6: #{tpu_custom_call.1} parent=1 // loop_footer
      %s25 = sadd.s32 1, %s21
    $region7: #{tpu_custom_call.1} parent=1 // loop_footer_branch
      %20 = sbr.rel target = $region3
    $region8: #{tpu_custom_call.1} parent=1 // loop_exit
      _
    %754 = vsyncpa [#allocation7], 1
    %s755 = scalar_lea.sflag [#allocation7], 1
    %756 = vsyncpa %s755, 1
  %757 = vsyncmov [#allocation3]
  %s758 = vpop.sfrf %757
  %p759 = scmp.eq.s32.totalorder %s758, 0
  %p760 = pneg %p759
  %762 = shalt.err (%p760)
  %s763 = scalar_lea.sflag [#allocation3], 1
  %764 = vsyncmov %s763
  %s765 = vpop.sfrf %764
  %p766 = scmp.eq.s32.totalorder %s765, 0
  %p767 = pneg %p766
  %769 = shalt.err (%p767)
  %s770 = scalar_lea.sflag [#allocation3], 2
  %771 = vsyncmov %s770
  %s772 = vpop.sfrf %771
  %p773 = scmp.eq.s32.totalorder %s772, 0
  %p774 = pneg %p773
  %776 = shalt.err (%p774)
  %s777 = scalar_lea.sflag [#allocation3], 3
  %778 = vsyncmov %s777
  %s779 = vpop.sfrf %778
  %p780 = scmp.eq.s32.totalorder %s779, 0
  %p781 = pneg %p780
  %783 = shalt.err (%p781)
  %s784 = scalar_lea.sflag [#allocation3], 4
  %785 = vsyncmov %s784
  %s786 = vpop.sfrf %785
  %p787 = scmp.eq.s32.totalorder %s786, 0
  %p788 = pneg %p787
  %790 = shalt.err (%p788)
  %s791 = scalar_lea.sflag [#allocation3], 5
  %792 = vsyncmov %s791
  %s793 = vpop.sfrf %792
  %p794 = scmp.eq.s32.totalorder %s793, 0
  %p795 = pneg %p794
  %797 = shalt.err (%p795)
  %s798 = scalar_lea.sflag [#allocation3], 6
  %799 = vsyncmov %s798
  %s800 = vpop.sfrf %799
  %p801 = scmp.eq.s32.totalorder %s800, 0
  %p802 = pneg %p801
  %804 = shalt.err (%p802)
  %s805 = scalar_lea.sflag [#allocation3], 7
  %806 = vsyncmov %s805
  %s807 = vpop.sfrf %806
  %p808 = scmp.eq.s32.totalorder %s807, 0
  %p809 = pneg %p808
  %811 = shalt.err (%p809)

</llo_original>
